<compile_context>
chip_gen: v7x
topology: tpu7x:2x2x1
jax: 0.10.0
libtpu: 0.0.40
codegen_flags: <defaults>
</compile_context>

<pallas_src>
import functools

import jax
import jax.numpy as jnp
from jax.experimental import pallas as pl
from jax.experimental.pallas import tpu as pltpu


def _round_up(x, m):
    return (x + m - 1) // m * m


def _cdiv(a, b):
    return -(-a // b)


_MIN_SPLIT_TILE = 2048   # only split the grid for multi-core if tiles stay this big


def _choose_batch_tiling(B, block_b):
    """Pick (TB, B_pad, num_steps): padding-aware, >=2 even steps for v7x 2-TC."""
    b_pad128 = _round_up(B, 128)
    num_steps = max(1, _cdiv(b_pad128, block_b))
    if num_steps == 1:
        if b_pad128 >= 2 * _MIN_SPLIT_TILE:
            num_steps = 2                       # let both v7x TensorCores work
    elif num_steps % 2 == 1:
        if _round_up(_cdiv(b_pad128, num_steps + 1), 128) >= _MIN_SPLIT_TILE:
            num_steps += 1                      # even step count -> balanced cores
    tb = _round_up(_cdiv(b_pad128, num_steps), 128)
    return tb, tb * num_steps, num_steps


def usad_kernel(
    x_ref,                                   # (n, TB)  flattened windows, batch on lanes
    ew1, eb1, ew2, eb2, ew3, eb3,            # encoder (layer 1 kept f32)
    dw1c, db1c, dw2c, db2c, dw3c, db3c,      # pass-1 fused decoder1+decoder2
    d21w, d21b, d22w, d22b, d23w, d23b,      # pass-2 decoder2 only
    out_ref,                                 # (3n, TB): rows [ae1 ; ae2 ; ae2ae1]
    *, n,
):
    def mm(w_ref, a):
        # Weights pre-cast to bf16 in glue; activations cast here; f32 accumulate.
        return jnp.dot(w_ref[...], a.astype(jnp.bfloat16),
                       preferred_element_type=jnp.float32)

    def relu(v):
        return jnp.maximum(v, 0.0)

    def sigmoid(v):
        # Exact logistic on the EUP; no abs/where/approx-reciprocal VPU work.
        return 0.5 * jnp.tanh(0.5 * v) + 0.5

    def encoder(v):
        # First layer in full f32 (raw input / ae1 precision), rest bf16 on MXU.
        h = relu(jnp.dot(ew1[...], v, preferred_element_type=jnp.float32) + eb1[...])
        h = relu(mm(ew2, h) + eb2[...])
        return relu(mm(ew3, h) + eb3[...])

    # ---- pass 1: z = encoder(x); ae1 = decoder1(z); ae2 = decoder2(z) -------
    z = encoder(x_ref[...])
    g = relu(mm(dw1c, z) + db1c[...])        # (2H, TB): [dec1 h1 ; dec2 h1]
    g = relu(mm(dw2c, g) + db2c[...])        # (2H, TB): block-diagonal layer 2
    g = sigmoid(mm(dw3c, g) + db3c[...])     # (2n, TB): [ae1 ; ae2]
    ae1 = g[:n]

    # ---- pass 2: ae2ae1 = decoder2(encoder(ae1)) (decoder1 half skipped) ----
    z2 = encoder(ae1)
    m = relu(mm(d21w, z2) + d21b[...])
    m = relu(mm(d22w, m) + d22b[...])
    ae2ae1 = sigmoid(mm(d23w, m) + d23b[...])

    # Two wide lane-dense stores per grid step.
    out_ref[:2 * n, :] = g.astype(out_ref.dtype)
    out_ref[2 * n:, :] = ae2ae1.astype(out_ref.dtype)


def _linear_params(key, in_dim, out_dim):
    """nn.Linear-style init; weight stored (out, in) like PyTorch, bias (out, 1)."""
    kw, kb = jax.random.split(key)
    bound = 1.0 / float(in_dim) ** 0.5
    w = jax.random.uniform(kw, (out_dim, in_dim), jnp.float32, -bound, bound)
    b = jax.random.uniform(kb, (out_dim, 1), jnp.float32, -bound, bound)
    return w, b


def init_usad_params(key, n_feats=4, n_hidden=16, n_latent=5, n_window=5):
    n = n_feats * n_window
    layers = {
        "e1": (n, n_hidden), "e2": (n_hidden, n_hidden), "e3": (n_hidden, n_latent),
        "d11": (n_latent, n_hidden), "d12": (n_hidden, n_hidden), "d13": (n_hidden, n),
        "d21": (n_latent, n_hidden), "d22": (n_hidden, n_hidden), "d23": (n_hidden, n),
    }
    params = {}
    keys = jax.random.split(key, len(layers))
    for k_, (name, (din, dout)) in zip(keys, layers.items()):
        w, b = _linear_params(k_, din, dout)
        params[name + "w"] = w
        params[name + "b"] = b
    return params


@functools.partial(
    jax.jit,
    static_argnames=("n_window", "n_feats", "n_hidden", "n_latent", "block_b"))
def usad_forward(g, params, n_window=5, n_feats=4, n_hidden=16, n_latent=5,
                 block_b=8192):
    """g: (B, n_window, n_feats) -> (ae1, ae2, ae2ae1), each (B, n_window, n_feats)."""
    B = g.shape[0]
    n = n_window * n_feats

    # nn.Flatten(), then batch on the 128-lane axis inside the kernel.
    xT = g.reshape(B, n).T                               # (n, B)
    TB, B_pad, num_steps = _choose_batch_tiling(B, block_b)
    if B_pad != B:
        xT = jnp.pad(xT, ((0, 0), (0, B_pad - B)))

    f32, bf16 = jnp.float32, jnp.bfloat16

    # Fused decoder weights for pass 1:
    #   layer 1: concat over the shared latent input z;
    #   layers 2/3: block-diagonal so one matmul covers both decoders (K doubled).
    zeros_hh = jnp.zeros((n_hidden, n_hidden), f32)
    zeros_nh = jnp.zeros((n, n_hidden), f32)
    dw1c = jnp.concatenate([params["d11w"], params["d21w"]], 0)                 # (2H, L)
    db1c = jnp.concatenate([params["d11b"], params["d21b"]], 0)
    dw2c = jnp.block([[params["d12w"], zeros_hh], [zeros_hh, params["d22w"]]])  # (2H, 2H)
    db2c = jnp.concatenate([params["d12b"], params["d22b"]], 0)
    dw3c = jnp.block([[params["d13w"], zeros_nh], [zeros_nh, params["d23w"]]])  # (2n, 2H)
    db3c = jnp.concatenate([params["d13b"], params["d23b"]], 0)

    # Pre-cast MXU weights to bf16 once (VMEM-resident -> no per-step cast).
    # Encoder layer 1 stays f32 (applies to the raw input / ae1). Biases stay f32.
    weights = [
        params["e1w"], params["e1b"],
        params["e2w"].astype(bf16), params["e2b"],
        params["e3w"].astype(bf16), params["e3b"],
        dw1c.astype(bf16), db1c,
        dw2c.astype(bf16), db2c,
        dw3c.astype(bf16), db3c,
        params["d21w"].astype(bf16), params["d21b"],
        params["d22w"].astype(bf16), params["d22b"],
        params["d23w"].astype(bf16), params["d23b"],
    ]

    grid = (num_steps,)
    x_spec = pl.BlockSpec((n, TB), lambda i: (0, i))
    w_specs = [pl.BlockSpec(w.shape, lambda i: (0, 0)) for w in weights]   # resident
    out_spec = pl.BlockSpec((3 * n, TB), lambda i: (0, i))

    # Advisory cost estimate (kernel is step-overhead / HBM / VPU bound).
    macs_per_elem = (
        (n * n_hidden + n_hidden * n_hidden + n_hidden * n_latent) * 2      # 2 encoders
        + (n_latent * 2 * n_hidden + (2 * n_hidden) ** 2 + 2 * n_hidden * 2 * n)  # fused dec
        + (n_latent * n_hidden + n_hidden * n_hidden + n_hidden * n))       # dec2 pass 2
    flops = 2 * macs_per_elem * B_pad
    transcendentals = 3 * n * B_pad
    bytes_accessed = (n + 3 * n) * 4 * B_pad + sum(w.size * w.dtype.itemsize
                                                   for w in weights)

    out = pl.pallas_call(
        functools.partial(usad_kernel, n=n),
        out_shape=jax.ShapeDtypeStruct((3 * n, B_pad), jnp.float32),
        grid=grid,
        in_specs=[x_spec] + w_specs,
        out_specs=out_spec,
        compiler_params=pltpu.CompilerParams(
            dimension_semantics=("parallel",),           # megacore / v7x 2-TC sharding
            vmem_limit_bytes=32 * 1024 * 1024),          # covers TB=8192 incl. on v5e
        cost_estimate=pl.CostEstimate(
            flops=flops,
            transcendentals=transcendentals,
            bytes_accessed=bytes_accessed),
    )(xT, *weights)

    # Single wrapper transpose back to batch-major, then split the three outputs.
    rec = out[:, :B].T                                   # (B, 3n)
    ae1 = rec[:, :n].reshape(-1, n_window, n_feats)
    ae2 = rec[:, n:2 * n].reshape(-1, n_window, n_feats)
    ae2ae1 = rec[:, 2 * n:].reshape(-1, n_window, n_feats)
    return ae1, ae2, ae2ae1


def usad_forward_ref(g, params, n_window=5, n_feats=4):
    """Plain-JAX f32 reference matching the PyTorch forward."""
    B = g.shape[0]
    x = g.reshape(B, n_window * n_feats)

    def lin(v, name):
        return v @ params[name + "w"].T + params[name + "b"][:, 0]

    def enc(v):
        h1 = jnp.maximum(lin(v, "e1"), 0.0)
        h2 = jnp.maximum(lin(h1, "e2"), 0.0)
        return jnp.maximum(lin(h2, "e3"), 0.0)

    def dec(z, p):
        h1 = jnp.maximum(lin(z, p + "1"), 0.0)
        h2 = jnp.maximum(lin(h1, p + "2"), 0.0)
        return jax.nn.sigmoid(lin(h2, p + "3"))

    z = enc(x)
    ae1 = dec(z, "d1")
    ae2 = dec(z, "d2")
    ae2ae1 = dec(enc(ae1), "d2")
    return tuple(a.reshape(-1, n_window, n_feats) for a in (ae1, ae2, ae2ae1))


if __name__ == "__main__":
    n_window, n_feats = 5, 4                  # n = 20, hidden = 16, latent = 5

    key = jax.random.PRNGKey(0)
    k_param, k_small, k_big = jax.random.split(key, 3)
    params = init_usad_params(k_param, n_feats=n_feats, n_window=n_window)

    # Small smoke test (single grid step).
    B = 8
    g_small = jax.random.normal(k_small, (B, n_window, n_feats), dtype=jnp.float32)
    outs = usad_forward(g_small, params, n_window=n_window, n_feats=n_feats)
    jax.block_until_ready(outs)
    refs = usad_forward_ref(g_small, params, n_window=n_window, n_feats=n_feats)
    for o, r in zip(outs, refs):
        assert o.shape == (B, n_window, n_feats)
        # bf16 middle layers -> loosened tolerance vs the f32 reference.
        assert jnp.allclose(o, r, atol=2e-2), float(jnp.max(jnp.abs(o - r)))

    # Larger batch: exercises the 2-step parallel grid + lane padding path.
    B2 = 4500
    g_big = jax.random.normal(k_big, (B2, n_window, n_feats), dtype=jnp.float32)
    outs2 = usad_forward(g_big, params, n_window=n_window, n_feats=n_feats)
    jax.block_until_ready(outs2)
    refs2 = usad_forward_ref(g_big, params, n_window=n_window, n_feats=n_feats)
    for o, r in zip(outs2, refs2):
        assert o.shape == (B2, n_window, n_feats)
        assert jnp.allclose(o, r, atol=2e-2), float(jnp.max(jnp.abs(o - r)))

    print("KERNEL_OK")
</pallas_src>

<mosaic_0001>
module attributes {stable_mosaic.version = 11 : i64} {
  func.func @usad_kernel(%arg0: i32, %arg1: memref<20x128xf32, #tpu.memory_space<vmem>>, %arg2: memref<16x20xf32, #tpu.memory_space<vmem>>, %arg3: memref<16x1xf32, #tpu.memory_space<vmem>>, %arg4: memref<16x16xbf16, #tpu.memory_space<vmem>>, %arg5: memref<16x1xf32, #tpu.memory_space<vmem>>, %arg6: memref<5x16xbf16, #tpu.memory_space<vmem>>, %arg7: memref<5x1xf32, #tpu.memory_space<vmem>>, %arg8: memref<32x5xbf16, #tpu.memory_space<vmem>>, %arg9: memref<32x1xf32, #tpu.memory_space<vmem>>, %arg10: memref<32x32xbf16, #tpu.memory_space<vmem>>, %arg11: memref<32x1xf32, #tpu.memory_space<vmem>>, %arg12: memref<40x32xbf16, #tpu.memory_space<vmem>>, %arg13: memref<40x1xf32, #tpu.memory_space<vmem>>, %arg14: memref<16x5xbf16, #tpu.memory_space<vmem>>, %arg15: memref<16x1xf32, #tpu.memory_space<vmem>>, %arg16: memref<16x16xbf16, #tpu.memory_space<vmem>>, %arg17: memref<16x1xf32, #tpu.memory_space<vmem>>, %arg18: memref<20x16xbf16, #tpu.memory_space<vmem>>, %arg19: memref<20x1xf32, #tpu.memory_space<vmem>>, %arg20: memref<60x128xf32, #tpu.memory_space<vmem>>) attributes {dimension_semantics = [#tpu.dimension_semantics<parallel>], iteration_bounds = array<i64: 1>, scalar_prefetch = 0 : i64, scratch_operands = 0 : i64, tpu.core_type = #tpu.core_type<tc>, window_params = [{transform_indices = @transform_0, window_bounds = array<i64: 20, 128>}, {pipeline_mode = #tpu.pipeline_mode<synchronous>, transform_indices = @transform_1, window_bounds = array<i64: 16, 20>}, {pipeline_mode = #tpu.pipeline_mode<synchronous>, transform_indices = @transform_2, window_bounds = array<i64: 16, 1>}, {pipeline_mode = #tpu.pipeline_mode<synchronous>, transform_indices = @transform_3, window_bounds = array<i64: 16, 16>}, {pipeline_mode = #tpu.pipeline_mode<synchronous>, transform_indices = @transform_4, window_bounds = array<i64: 16, 1>}, {pipeline_mode = #tpu.pipeline_mode<synchronous>, transform_indices = @transform_5, window_bounds = array<i64: 5, 16>}, {pipeline_mode = #tpu.pipeline_mode<synchronous>, transform_indices = @transform_6, window_bounds = array<i64: 5, 1>}, {pipeline_mode = #tpu.pipeline_mode<synchronous>, transform_indices = @transform_7, window_bounds = array<i64: 32, 5>}, {pipeline_mode = #tpu.pipeline_mode<synchronous>, transform_indices = @transform_8, window_bounds = array<i64: 32, 1>}, {pipeline_mode = #tpu.pipeline_mode<synchronous>, transform_indices = @transform_9, window_bounds = array<i64: 32, 32>}, {pipeline_mode = #tpu.pipeline_mode<synchronous>, transform_indices = @transform_10, window_bounds = array<i64: 32, 1>}, {pipeline_mode = #tpu.pipeline_mode<synchronous>, transform_indices = @transform_11, window_bounds = array<i64: 40, 32>}, {pipeline_mode = #tpu.pipeline_mode<synchronous>, transform_indices = @transform_12, window_bounds = array<i64: 40, 1>}, {pipeline_mode = #tpu.pipeline_mode<synchronous>, transform_indices = @transform_13, window_bounds = array<i64: 16, 5>}, {pipeline_mode = #tpu.pipeline_mode<synchronous>, transform_indices = @transform_14, window_bounds = array<i64: 16, 1>}, {pipeline_mode = #tpu.pipeline_mode<synchronous>, transform_indices = @transform_15, window_bounds = array<i64: 16, 16>}, {pipeline_mode = #tpu.pipeline_mode<synchronous>, transform_indices = @transform_16, window_bounds = array<i64: 16, 1>}, {pipeline_mode = #tpu.pipeline_mode<synchronous>, transform_indices = @transform_17, window_bounds = array<i64: 20, 16>}, {pipeline_mode = #tpu.pipeline_mode<synchronous>, transform_indices = @transform_18, window_bounds = array<i64: 20, 1>}, {transform_indices = @transform_19, window_bounds = array<i64: 60, 128>}]} {
    %c0 = arith.constant 0 : index
    %c0_0 = arith.constant 0 : index
    %0 = vector.load %arg1[%c0, %c0_0] : memref<20x128xf32, #tpu.memory_space<vmem>>, vector<20x128xf32>
    %c0_1 = arith.constant 0 : index
    %c0_2 = arith.constant 0 : index
    %1 = vector.load %arg2[%c0_1, %c0_2] : memref<16x20xf32, #tpu.memory_space<vmem>>, vector<16x20xf32>
    %cst = arith.constant dense<0.000000e+00> : vector<16x128xf32>
    %2 = tpu.matmul %1, %0, %cst {dimension_numbers = #tpu.dot_dimension_numbers<[1], [0], [0], [1], [0, 0, 1, 1], [], []>} : vector<16x20xf32>, vector<20x128xf32>, vector<16x128xf32> -> vector<16x128xf32>
    %c0_3 = arith.constant 0 : index
    %c0_4 = arith.constant 0 : index
    %3 = vector.load %arg3[%c0_3, %c0_4] : memref<16x1xf32, #tpu.memory_space<vmem>>, vector<16x1xf32>
    %4 = vector.broadcast %3 : vector<16x1xf32> to vector<16x128xf32>
    %5 = arith.addf %2, %4 : vector<16x128xf32>
    %cst_5 = arith.constant 0.000000e+00 : f32
    %6 = vector.broadcast %cst_5 : f32 to vector<16x128xf32>
    %7 = arith.maximumf %5, %6 : vector<16x128xf32>
    %c0_6 = arith.constant 0 : index
    %c0_7 = arith.constant 0 : index
    %8 = vector.load %arg4[%c0_6, %c0_7] : memref<16x16xbf16, #tpu.memory_space<vmem>>, vector<16x16xbf16>
    %9 = arith.truncf %7 : vector<16x128xf32> to vector<16x128xbf16>
    %cst_8 = arith.constant dense<0.000000e+00> : vector<16x128xf32>
    %10 = tpu.matmul %8, %9, %cst_8 {dimension_numbers = #tpu.dot_dimension_numbers<[1], [0], [0], [1], [0, 0, 1, 1], [], []>} : vector<16x16xbf16>, vector<16x128xbf16>, vector<16x128xf32> -> vector<16x128xf32>
    %c0_9 = arith.constant 0 : index
    %c0_10 = arith.constant 0 : index
    %11 = vector.load %arg5[%c0_9, %c0_10] : memref<16x1xf32, #tpu.memory_space<vmem>>, vector<16x1xf32>
    %12 = vector.broadcast %11 : vector<16x1xf32> to vector<16x128xf32>
    %13 = arith.addf %10, %12 : vector<16x128xf32>
    %cst_11 = arith.constant 0.000000e+00 : f32
    %14 = vector.broadcast %cst_11 : f32 to vector<16x128xf32>
    %15 = arith.maximumf %13, %14 : vector<16x128xf32>
    %c0_12 = arith.constant 0 : index
    %c0_13 = arith.constant 0 : index
    %16 = vector.load %arg6[%c0_12, %c0_13] : memref<5x16xbf16, #tpu.memory_space<vmem>>, vector<5x16xbf16>
    %17 = arith.truncf %15 : vector<16x128xf32> to vector<16x128xbf16>
    %cst_14 = arith.constant dense<0.000000e+00> : vector<5x128xf32>
    %18 = tpu.matmul %16, %17, %cst_14 {dimension_numbers = #tpu.dot_dimension_numbers<[1], [0], [0], [1], [0, 0, 1, 1], [], []>} : vector<5x16xbf16>, vector<16x128xbf16>, vector<5x128xf32> -> vector<5x128xf32>
    %c0_15 = arith.constant 0 : index
    %c0_16 = arith.constant 0 : index
    %19 = vector.load %arg7[%c0_15, %c0_16] : memref<5x1xf32, #tpu.memory_space<vmem>>, vector<5x1xf32>
    %20 = vector.broadcast %19 : vector<5x1xf32> to vector<5x128xf32>
    %21 = arith.addf %18, %20 : vector<5x128xf32>
    %cst_17 = arith.constant 0.000000e+00 : f32
    %22 = vector.broadcast %cst_17 : f32 to vector<5x128xf32>
    %23 = arith.maximumf %21, %22 : vector<5x128xf32>
    %c0_18 = arith.constant 0 : index
    %c0_19 = arith.constant 0 : index
    %24 = vector.load %arg8[%c0_18, %c0_19] : memref<32x5xbf16, #tpu.memory_space<vmem>>, vector<32x5xbf16>
    %25 = arith.truncf %23 : vector<5x128xf32> to vector<5x128xbf16>
    %cst_20 = arith.constant dense<0.000000e+00> : vector<32x128xf32>
    %26 = tpu.matmul %24, %25, %cst_20 {dimension_numbers = #tpu.dot_dimension_numbers<[1], [0], [0], [1], [0, 0, 1, 1], [], []>} : vector<32x5xbf16>, vector<5x128xbf16>, vector<32x128xf32> -> vector<32x128xf32>
    %c0_21 = arith.constant 0 : index
    %c0_22 = arith.constant 0 : index
    %27 = vector.load %arg9[%c0_21, %c0_22] : memref<32x1xf32, #tpu.memory_space<vmem>>, vector<32x1xf32>
    %28 = vector.broadcast %27 : vector<32x1xf32> to vector<32x128xf32>
    %29 = arith.addf %26, %28 : vector<32x128xf32>
    %cst_23 = arith.constant 0.000000e+00 : f32
    %30 = vector.broadcast %cst_23 : f32 to vector<32x128xf32>
    %31 = arith.maximumf %29, %30 : vector<32x128xf32>
    %c0_24 = arith.constant 0 : index
    %c0_25 = arith.constant 0 : index
    %32 = vector.load %arg10[%c0_24, %c0_25] : memref<32x32xbf16, #tpu.memory_space<vmem>>, vector<32x32xbf16>
    %33 = arith.truncf %31 : vector<32x128xf32> to vector<32x128xbf16>
    %cst_26 = arith.constant dense<0.000000e+00> : vector<32x128xf32>
    %34 = tpu.matmul %32, %33, %cst_26 {dimension_numbers = #tpu.dot_dimension_numbers<[1], [0], [0], [1], [0, 0, 1, 1], [], []>} : vector<32x32xbf16>, vector<32x128xbf16>, vector<32x128xf32> -> vector<32x128xf32>
    %c0_27 = arith.constant 0 : index
    %c0_28 = arith.constant 0 : index
    %35 = vector.load %arg11[%c0_27, %c0_28] : memref<32x1xf32, #tpu.memory_space<vmem>>, vector<32x1xf32>
    %36 = vector.broadcast %35 : vector<32x1xf32> to vector<32x128xf32>
    %37 = arith.addf %34, %36 : vector<32x128xf32>
    %cst_29 = arith.constant 0.000000e+00 : f32
    %38 = vector.broadcast %cst_29 : f32 to vector<32x128xf32>
    %39 = arith.maximumf %37, %38 : vector<32x128xf32>
    %c0_30 = arith.constant 0 : index
    %c0_31 = arith.constant 0 : index
    %40 = vector.load %arg12[%c0_30, %c0_31] : memref<40x32xbf16, #tpu.memory_space<vmem>>, vector<40x32xbf16>
    %41 = arith.truncf %39 : vector<32x128xf32> to vector<32x128xbf16>
    %cst_32 = arith.constant dense<0.000000e+00> : vector<40x128xf32>
    %42 = tpu.matmul %40, %41, %cst_32 {dimension_numbers = #tpu.dot_dimension_numbers<[1], [0], [0], [1], [0, 0, 1, 1], [], []>} : vector<40x32xbf16>, vector<32x128xbf16>, vector<40x128xf32> -> vector<40x128xf32>
    %c0_33 = arith.constant 0 : index
    %c0_34 = arith.constant 0 : index
    %43 = vector.load %arg13[%c0_33, %c0_34] : memref<40x1xf32, #tpu.memory_space<vmem>>, vector<40x1xf32>
    %44 = vector.broadcast %43 : vector<40x1xf32> to vector<40x128xf32>
    %45 = arith.addf %42, %44 : vector<40x128xf32>
    %cst_35 = arith.constant 5.000000e-01 : f32
    %46 = vector.broadcast %cst_35 : f32 to vector<40x128xf32>
    %47 = arith.mulf %46, %45 : vector<40x128xf32>
    %48 = math.tanh %47 : vector<40x128xf32>
    %cst_36 = arith.constant 5.000000e-01 : f32
    %49 = vector.broadcast %cst_36 : f32 to vector<40x128xf32>
    %50 = arith.mulf %49, %48 : vector<40x128xf32>
    %cst_37 = arith.constant 5.000000e-01 : f32
    %51 = vector.broadcast %cst_37 : f32 to vector<40x128xf32>
    %52 = arith.addf %50, %51 : vector<40x128xf32>
    %53 = vector.extract_strided_slice %52 {offsets = [0, 0], sizes = [20, 128], strides = [1, 1]} : vector<40x128xf32> to vector<20x128xf32>
    %c0_38 = arith.constant 0 : index
    %c0_39 = arith.constant 0 : index
    %54 = vector.load %arg2[%c0_38, %c0_39] : memref<16x20xf32, #tpu.memory_space<vmem>>, vector<16x20xf32>
    %cst_40 = arith.constant dense<0.000000e+00> : vector<16x128xf32>
    %55 = tpu.matmul %54, %53, %cst_40 {dimension_numbers = #tpu.dot_dimension_numbers<[1], [0], [0], [1], [0, 0, 1, 1], [], []>} : vector<16x20xf32>, vector<20x128xf32>, vector<16x128xf32> -> vector<16x128xf32>
    %c0_41 = arith.constant 0 : index
    %c0_42 = arith.constant 0 : index
    %56 = vector.load %arg3[%c0_41, %c0_42] : memref<16x1xf32, #tpu.memory_space<vmem>>, vector<16x1xf32>
    %57 = vector.broadcast %56 : vector<16x1xf32> to vector<16x128xf32>
    %58 = arith.addf %55, %57 : vector<16x128xf32>
    %cst_43 = arith.constant 0.000000e+00 : f32
    %59 = vector.broadcast %cst_43 : f32 to vector<16x128xf32>
    %60 = arith.maximumf %58, %59 : vector<16x128xf32>
    %c0_44 = arith.constant 0 : index
    %c0_45 = arith.constant 0 : index
    %61 = vector.load %arg4[%c0_44, %c0_45] : memref<16x16xbf16, #tpu.memory_space<vmem>>, vector<16x16xbf16>
    %62 = arith.truncf %60 : vector<16x128xf32> to vector<16x128xbf16>
    %cst_46 = arith.constant dense<0.000000e+00> : vector<16x128xf32>
    %63 = tpu.matmul %61, %62, %cst_46 {dimension_numbers = #tpu.dot_dimension_numbers<[1], [0], [0], [1], [0, 0, 1, 1], [], []>} : vector<16x16xbf16>, vector<16x128xbf16>, vector<16x128xf32> -> vector<16x128xf32>
    %c0_47 = arith.constant 0 : index
    %c0_48 = arith.constant 0 : index
    %64 = vector.load %arg5[%c0_47, %c0_48] : memref<16x1xf32, #tpu.memory_space<vmem>>, vector<16x1xf32>
    %65 = vector.broadcast %64 : vector<16x1xf32> to vector<16x128xf32>
    %66 = arith.addf %63, %65 : vector<16x128xf32>
    %cst_49 = arith.constant 0.000000e+00 : f32
    %67 = vector.broadcast %cst_49 : f32 to vector<16x128xf32>
    %68 = arith.maximumf %66, %67 : vector<16x128xf32>
    %c0_50 = arith.constant 0 : index
    %c0_51 = arith.constant 0 : index
    %69 = vector.load %arg6[%c0_50, %c0_51] : memref<5x16xbf16, #tpu.memory_space<vmem>>, vector<5x16xbf16>
    %70 = arith.truncf %68 : vector<16x128xf32> to vector<16x128xbf16>
    %cst_52 = arith.constant dense<0.000000e+00> : vector<5x128xf32>
    %71 = tpu.matmul %69, %70, %cst_52 {dimension_numbers = #tpu.dot_dimension_numbers<[1], [0], [0], [1], [0, 0, 1, 1], [], []>} : vector<5x16xbf16>, vector<16x128xbf16>, vector<5x128xf32> -> vector<5x128xf32>
    %c0_53 = arith.constant 0 : index
    %c0_54 = arith.constant 0 : index
    %72 = vector.load %arg7[%c0_53, %c0_54] : memref<5x1xf32, #tpu.memory_space<vmem>>, vector<5x1xf32>
    %73 = vector.broadcast %72 : vector<5x1xf32> to vector<5x128xf32>
    %74 = arith.addf %71, %73 : vector<5x128xf32>
    %cst_55 = arith.constant 0.000000e+00 : f32
    %75 = vector.broadcast %cst_55 : f32 to vector<5x128xf32>
    %76 = arith.maximumf %74, %75 : vector<5x128xf32>
    %c0_56 = arith.constant 0 : index
    %c0_57 = arith.constant 0 : index
    %77 = vector.load %arg14[%c0_56, %c0_57] : memref<16x5xbf16, #tpu.memory_space<vmem>>, vector<16x5xbf16>
    %78 = arith.truncf %76 : vector<5x128xf32> to vector<5x128xbf16>
    %cst_58 = arith.constant dense<0.000000e+00> : vector<16x128xf32>
    %79 = tpu.matmul %77, %78, %cst_58 {dimension_numbers = #tpu.dot_dimension_numbers<[1], [0], [0], [1], [0, 0, 1, 1], [], []>} : vector<16x5xbf16>, vector<5x128xbf16>, vector<16x128xf32> -> vector<16x128xf32>
    %c0_59 = arith.constant 0 : index
    %c0_60 = arith.constant 0 : index
    %80 = vector.load %arg15[%c0_59, %c0_60] : memref<16x1xf32, #tpu.memory_space<vmem>>, vector<16x1xf32>
    %81 = vector.broadcast %80 : vector<16x1xf32> to vector<16x128xf32>
    %82 = arith.addf %79, %81 : vector<16x128xf32>
    %cst_61 = arith.constant 0.000000e+00 : f32
    %83 = vector.broadcast %cst_61 : f32 to vector<16x128xf32>
    %84 = arith.maximumf %82, %83 : vector<16x128xf32>
    %c0_62 = arith.constant 0 : index
    %c0_63 = arith.constant 0 : index
    %85 = vector.load %arg16[%c0_62, %c0_63] : memref<16x16xbf16, #tpu.memory_space<vmem>>, vector<16x16xbf16>
    %86 = arith.truncf %84 : vector<16x128xf32> to vector<16x128xbf16>
    %cst_64 = arith.constant dense<0.000000e+00> : vector<16x128xf32>
    %87 = tpu.matmul %85, %86, %cst_64 {dimension_numbers = #tpu.dot_dimension_numbers<[1], [0], [0], [1], [0, 0, 1, 1], [], []>} : vector<16x16xbf16>, vector<16x128xbf16>, vector<16x128xf32> -> vector<16x128xf32>
    %c0_65 = arith.constant 0 : index
    %c0_66 = arith.constant 0 : index
    %88 = vector.load %arg17[%c0_65, %c0_66] : memref<16x1xf32, #tpu.memory_space<vmem>>, vector<16x1xf32>
    %89 = vector.broadcast %88 : vector<16x1xf32> to vector<16x128xf32>
    %90 = arith.addf %87, %89 : vector<16x128xf32>
    %cst_67 = arith.constant 0.000000e+00 : f32
    %91 = vector.broadcast %cst_67 : f32 to vector<16x128xf32>
    %92 = arith.maximumf %90, %91 : vector<16x128xf32>
    %c0_68 = arith.constant 0 : index
    %c0_69 = arith.constant 0 : index
    %93 = vector.load %arg18[%c0_68, %c0_69] : memref<20x16xbf16, #tpu.memory_space<vmem>>, vector<20x16xbf16>
    %94 = arith.truncf %92 : vector<16x128xf32> to vector<16x128xbf16>
    %cst_70 = arith.constant dense<0.000000e+00> : vector<20x128xf32>
    %95 = tpu.matmul %93, %94, %cst_70 {dimension_numbers = #tpu.dot_dimension_numbers<[1], [0], [0], [1], [0, 0, 1, 1], [], []>} : vector<20x16xbf16>, vector<16x128xbf16>, vector<20x128xf32> -> vector<20x128xf32>
    %c0_71 = arith.constant 0 : index
    %c0_72 = arith.constant 0 : index
    %96 = vector.load %arg19[%c0_71, %c0_72] : memref<20x1xf32, #tpu.memory_space<vmem>>, vector<20x1xf32>
    %97 = vector.broadcast %96 : vector<20x1xf32> to vector<20x128xf32>
    %98 = arith.addf %95, %97 : vector<20x128xf32>
    %cst_73 = arith.constant 5.000000e-01 : f32
    %99 = vector.broadcast %cst_73 : f32 to vector<20x128xf32>
    %100 = arith.mulf %99, %98 : vector<20x128xf32>
    %101 = math.tanh %100 : vector<20x128xf32>
    %cst_74 = arith.constant 5.000000e-01 : f32
    %102 = vector.broadcast %cst_74 : f32 to vector<20x128xf32>
    %103 = arith.mulf %102, %101 : vector<20x128xf32>
    %cst_75 = arith.constant 5.000000e-01 : f32
    %104 = vector.broadcast %cst_75 : f32 to vector<20x128xf32>
    %105 = arith.addf %103, %104 : vector<20x128xf32>
    %c0_76 = arith.constant 0 : index
    %c0_77 = arith.constant 0 : index
    %106 = vector.load %arg20[%c0_76, %c0_77] : memref<60x128xf32, #tpu.memory_space<vmem>>, vector<40x128xf32>
    tpu.vector_store %arg20[%c0_76, %c0_77], %52 {strides = array<i32>} : memref<60x128xf32, #tpu.memory_space<vmem>>, vector<40x128xf32>,
    %c40 = arith.constant 40 : index
    %c0_78 = arith.constant 0 : index
    %107 = vector.load %arg20[%c40, %c0_78] : memref<60x128xf32, #tpu.memory_space<vmem>>, vector<20x128xf32>
    tpu.vector_store %arg20[%c40, %c0_78], %105 {strides = array<i32>} : memref<60x128xf32, #tpu.memory_space<vmem>>, vector<20x128xf32>,
    return
  }
  func.func @transform_0(%arg0: i32) -> (i32, i32) {
    %c0_i32 = arith.constant 0 : i32
    %c0_i32_0 = arith.constant 0 : i32
    return %c0_i32, %arg0 : i32, i32
  }
  func.func @transform_1(%arg0: i32) -> (i32, i32) {
    %c0_i32 = arith.constant 0 : i32
    %c0_i32_0 = arith.constant 0 : i32
    %c0_i32_1 = arith.constant 0 : i32
    return %c0_i32, %c0_i32_0 : i32, i32
  }
  func.func @transform_2(%arg0: i32) -> (i32, i32) {
    %c0_i32 = arith.constant 0 : i32
    %c0_i32_0 = arith.constant 0 : i32
    %c0_i32_1 = arith.constant 0 : i32
    return %c0_i32, %c0_i32_0 : i32, i32
  }
  func.func @transform_3(%arg0: i32) -> (i32, i32) {
    %c0_i32 = arith.constant 0 : i32
    %c0_i32_0 = arith.constant 0 : i32
    %c0_i32_1 = arith.constant 0 : i32
    return %c0_i32, %c0_i32_0 : i32, i32
  }
  func.func @transform_4(%arg0: i32) -> (i32, i32) {
    %c0_i32 = arith.constant 0 : i32
    %c0_i32_0 = arith.constant 0 : i32
    %c0_i32_1 = arith.constant 0 : i32
    return %c0_i32, %c0_i32_0 : i32, i32
  }
  func.func @transform_5(%arg0: i32) -> (i32, i32) {
    %c0_i32 = arith.constant 0 : i32
    %c0_i32_0 = arith.constant 0 : i32
    %c0_i32_1 = arith.constant 0 : i32
    return %c0_i32, %c0_i32_0 : i32, i32
  }
  func.func @transform_6(%arg0: i32) -> (i32, i32) {
    %c0_i32 = arith.constant 0 : i32
    %c0_i32_0 = arith.constant 0 : i32
    %c0_i32_1 = arith.constant 0 : i32
    return %c0_i32, %c0_i32_0 : i32, i32
  }
  func.func @transform_7(%arg0: i32) -> (i32, i32) {
    %c0_i32 = arith.constant 0 : i32
    %c0_i32_0 = arith.constant 0 : i32
    %c0_i32_1 = arith.constant 0 : i32
    return %c0_i32, %c0_i32_0 : i32, i32
  }
  func.func @transform_8(%arg0: i32) -> (i32, i32) {
    %c0_i32 = arith.constant 0 : i32
    %c0_i32_0 = arith.constant 0 : i32
    %c0_i32_1 = arith.constant 0 : i32
    return %c0_i32, %c0_i32_0 : i32, i32
  }
  func.func @transform_9(%arg0: i32) -> (i32, i32) {
    %c0_i32 = arith.constant 0 : i32
    %c0_i32_0 = arith.constant 0 : i32
    %c0_i32_1 = arith.constant 0 : i32
    return %c0_i32, %c0_i32_0 : i32, i32
  }
  func.func @transform_10(%arg0: i32) -> (i32, i32) {
    %c0_i32 = arith.constant 0 : i32
    %c0_i32_0 = arith.constant 0 : i32
    %c0_i32_1 = arith.constant 0 : i32
    return %c0_i32, %c0_i32_0 : i32, i32
  }
  func.func @transform_11(%arg0: i32) -> (i32, i32) {
    %c0_i32 = arith.constant 0 : i32
    %c0_i32_0 = arith.constant 0 : i32
    %c0_i32_1 = arith.constant 0 : i32
    return %c0_i32, %c0_i32_0 : i32, i32
  }
  func.func @transform_12(%arg0: i32) -> (i32, i32) {
    %c0_i32 = arith.constant 0 : i32
    %c0_i32_0 = arith.constant 0 : i32
    %c0_i32_1 = arith.constant 0 : i32
    return %c0_i32, %c0_i32_0 : i32, i32
  }
  func.func @transform_13(%arg0: i32) -> (i32, i32) {
    %c0_i32 = arith.constant 0 : i32
    %c0_i32_0 = arith.constant 0 : i32
    %c0_i32_1 = arith.constant 0 : i32
    return %c0_i32, %c0_i32_0 : i32, i32
  }
  func.func @transform_14(%arg0: i32) -> (i32, i32) {
    %c0_i32 = arith.constant 0 : i32
    %c0_i32_0 = arith.constant 0 : i32
    %c0_i32_1 = arith.constant 0 : i32
    return %c0_i32, %c0_i32_0 : i32, i32
  }
  func.func @transform_15(%arg0: i32) -> (i32, i32) {
    %c0_i32 = arith.constant 0 : i32
    %c0_i32_0 = arith.constant 0 : i32
    %c0_i32_1 = arith.constant 0 : i32
    return %c0_i32, %c0_i32_0 : i32, i32
  }
  func.func @transform_16(%arg0: i32) -> (i32, i32) {
    %c0_i32 = arith.constant 0 : i32
    %c0_i32_0 = arith.constant 0 : i32
    %c0_i32_1 = arith.constant 0 : i32
    return %c0_i32, %c0_i32_0 : i32, i32
  }
  func.func @transform_17(%arg0: i32) -> (i32, i32) {
    %c0_i32 = arith.constant 0 : i32
    %c0_i32_0 = arith.constant 0 : i32
    %c0_i32_1 = arith.constant 0 : i32
    return %c0_i32, %c0_i32_0 : i32, i32
  }
  func.func @transform_18(%arg0: i32) -> (i32, i32) {
    %c0_i32 = arith.constant 0 : i32
    %c0_i32_0 = arith.constant 0 : i32
    %c0_i32_1 = arith.constant 0 : i32
    return %c0_i32, %c0_i32_0 : i32, i32
  }
  func.func @transform_19(%arg0: i32) -> (i32, i32) {
    %c0_i32 = arith.constant 0 : i32
    %c0_i32_0 = arith.constant 0 : i32
    return %c0_i32, %arg0 : i32, i32
  }
}

</mosaic_0001>

<llo_original>
// kernel: usad_forward.1
$region0: #{usad_forward.1}
  #allocation0 [shape = 'u32[]', space=smem, size = 0x4, offset = 0x4, fixed_abs, tag = 'smem constant byte address 0x4 - core index']
  #allocation1 [shape = 'u32[144,128]{1,0:T(1,128)}', space=vmem, size = 0x12000, scoped, tag = 'internal scratch']
  %s0 = inlined_call_operand.vmem [shape: f32[20,128], index: 0, kind: input, shape index: {}]
  %s1 = inlined_call_operand.vmem [shape: f32[16,20], index: 1, kind: input, shape index: {}]
  %s2 = inlined_call_operand.vmem [shape: f32[16,1], index: 2, kind: input, shape index: {}]
  %s3 = inlined_call_operand.vmem [shape: bf16[16,16], index: 3, kind: input, shape index: {}]
  %s4 = inlined_call_operand.vmem [shape: f32[16,1], index: 4, kind: input, shape index: {}]
  %s5 = inlined_call_operand.vmem [shape: bf16[5,16], index: 5, kind: input, shape index: {}]
  %s6 = inlined_call_operand.vmem [shape: f32[5,1], index: 6, kind: input, shape index: {}]
  %s7 = inlined_call_operand.vmem [shape: bf16[32,5], index: 7, kind: input, shape index: {}]
  %s8 = inlined_call_operand.vmem [shape: f32[32,1], index: 8, kind: input, shape index: {}]
  %s9 = inlined_call_operand.vmem [shape: bf16[32,32], index: 9, kind: input, shape index: {}]
  %s10 = inlined_call_operand.vmem [shape: f32[32,1], index: 10, kind: input, shape index: {}]
  %s11 = inlined_call_operand.vmem [shape: bf16[40,32], index: 11, kind: input, shape index: {}]
  %s12 = inlined_call_operand.vmem [shape: f32[40,1], index: 12, kind: input, shape index: {}]
  %s13 = inlined_call_operand.vmem [shape: bf16[16,5], index: 13, kind: input, shape index: {}]
  %s14 = inlined_call_operand.vmem [shape: f32[16,1], index: 14, kind: input, shape index: {}]
  %s15 = inlined_call_operand.vmem [shape: bf16[16,16], index: 15, kind: input, shape index: {}]
  %s16 = inlined_call_operand.vmem [shape: f32[16,1], index: 16, kind: input, shape index: {}]
  %s17 = inlined_call_operand.vmem [shape: bf16[20,16], index: 17, kind: input, shape index: {}]
  %s18 = inlined_call_operand.vmem [shape: f32[20,1], index: 18, kind: input, shape index: {}]
  %s19 = inlined_call_operand.vmem [shape: f32[60,128], index: 19, kind: output, shape index: {}]
  %s20 = sld [smem:[#allocation0]]
  $region86: #{usad_forward.1} parent=0
    _
  %s22 = ssub.s32 1, %s20
  %s23 = scalar_select 0, %s22, %s20
  // Predicated region
  $region2: #{usad_forward.1} parent=0 // pred_check
    _
  $region3: #{usad_forward.1} parent=0 // pred_check_branch
    %25 = sbr.rel (0) target = $region5
  $region4: #{usad_forward.1} parent=0 // pred_region
    _
  $region5: #{usad_forward.1} parent=0 // pred_fallthru
    _
  // Predicated region
  $region6: #{usad_forward.1} parent=0 // pred_check
    _
  $region7: #{usad_forward.1} parent=0 // pred_check_branch
    %27 = sbr.rel (0) target = $region9
  $region8: #{usad_forward.1} parent=0 // pred_region
    _
  $region9: #{usad_forward.1} parent=0 // pred_fallthru
    _
  // Predicated region
  $region10: #{usad_forward.1} parent=0 // pred_check
    _
  $region11: #{usad_forward.1} parent=0 // pred_check_branch
    %29 = sbr.rel (0) target = $region13
  $region12: #{usad_forward.1} parent=0 // pred_region
    _
  $region13: #{usad_forward.1} parent=0 // pred_fallthru
    _
  // Predicated region
  $region14: #{usad_forward.1} parent=0 // pred_check
    _
  $region15: #{usad_forward.1} parent=0 // pred_check_branch
    %31 = sbr.rel (0) target = $region17
  $region16: #{usad_forward.1} parent=0 // pred_region
    _
  $region17: #{usad_forward.1} parent=0 // pred_fallthru
    _
  // Predicated region
  $region18: #{usad_forward.1} parent=0 // pred_check
    _
  $region19: #{usad_forward.1} parent=0 // pred_check_branch
    %33 = sbr.rel (0) target = $region21
  $region20: #{usad_forward.1} parent=0 // pred_region
    _
  $region21: #{usad_forward.1} parent=0 // pred_fallthru
    _
  // Predicated region
  $region22: #{usad_forward.1} parent=0 // pred_check
    _
  $region23: #{usad_forward.1} parent=0 // pred_check_branch
    %35 = sbr.rel (0) target = $region25
  $region24: #{usad_forward.1} parent=0 // pred_region
    _
  $region25: #{usad_forward.1} parent=0 // pred_fallthru
    _
  // Predicated region
  $region26: #{usad_forward.1} parent=0 // pred_check
    _
  $region27: #{usad_forward.1} parent=0 // pred_check_branch
    %37 = sbr.rel (0) target = $region29
  $region28: #{usad_forward.1} parent=0 // pred_region
    _
  $region29: #{usad_forward.1} parent=0 // pred_fallthru
    _
  // Predicated region
  $region30: #{usad_forward.1} parent=0 // pred_check
    _
  $region31: #{usad_forward.1} parent=0 // pred_check_branch
    %39 = sbr.rel (0) target = $region33
  $region32: #{usad_forward.1} parent=0 // pred_region
    _
  $region33: #{usad_forward.1} parent=0 // pred_fallthru
    _
  // Predicated region
  $region34: #{usad_forward.1} parent=0 // pred_check
    _
  $region35: #{usad_forward.1} parent=0 // pred_check_branch
    %41 = sbr.rel (0) target = $region37
  $region36: #{usad_forward.1} parent=0 // pred_region
    _
  $region37: #{usad_forward.1} parent=0 // pred_fallthru
    _
  // Predicated region
  $region38: #{usad_forward.1} parent=0 // pred_check
    _
  $region39: #{usad_forward.1} parent=0 // pred_check_branch
    %43 = sbr.rel (0) target = $region41
  $region40: #{usad_forward.1} parent=0 // pred_region
    _
  $region41: #{usad_forward.1} parent=0 // pred_fallthru
    _
  // Predicated region
  $region42: #{usad_forward.1} parent=0 // pred_check
    _
  $region43: #{usad_forward.1} parent=0 // pred_check_branch
    %45 = sbr.rel (0) target = $region45
  $region44: #{usad_forward.1} parent=0 // pred_region
    _
  $region45: #{usad_forward.1} parent=0 // pred_fallthru
    _
  // Predicated region
  $region46: #{usad_forward.1} parent=0 // pred_check
    _
  $region47: #{usad_forward.1} parent=0 // pred_check_branch
    %47 = sbr.rel (0) target = $region49
  $region48: #{usad_forward.1} parent=0 // pred_region
    _
  $region49: #{usad_forward.1} parent=0 // pred_fallthru
    _
  // Predicated region
  $region50: #{usad_forward.1} parent=0 // pred_check
    _
  $region51: #{usad_forward.1} parent=0 // pred_check_branch
    %49 = sbr.rel (0) target = $region53
  $region52: #{usad_forward.1} parent=0 // pred_region
    _
  $region53: #{usad_forward.1} parent=0 // pred_fallthru
    _
  // Predicated region
  $region54: #{usad_forward.1} parent=0 // pred_check
    _
  $region55: #{usad_forward.1} parent=0 // pred_check_branch
    %51 = sbr.rel (0) target = $region57
  $region56: #{usad_forward.1} parent=0 // pred_region
    _
  $region57: #{usad_forward.1} parent=0 // pred_fallthru
    _
  // Predicated region
  $region58: #{usad_forward.1} parent=0 // pred_check
    _
  $region59: #{usad_forward.1} parent=0 // pred_check_branch
    %53 = sbr.rel (0) target = $region61
  $region60: #{usad_forward.1} parent=0 // pred_region
    _
  $region61: #{usad_forward.1} parent=0 // pred_fallthru
    _
  // Predicated region
  $region62: #{usad_forward.1} parent=0 // pred_check
    _
  $region63: #{usad_forward.1} parent=0 // pred_check_branch
    %55 = sbr.rel (0) target = $region65
  $region64: #{usad_forward.1} parent=0 // pred_region
    _
  $region65: #{usad_forward.1} parent=0 // pred_fallthru
    _
  // Predicated region
  $region66: #{usad_forward.1} parent=0 // pred_check
    _
  $region67: #{usad_forward.1} parent=0 // pred_check_branch
    %57 = sbr.rel (0) target = $region69
  $region68: #{usad_forward.1} parent=0 // pred_region
    _
  $region69: #{usad_forward.1} parent=0 // pred_fallthru
    _
  // Predicated region
  $region70: #{usad_forward.1} parent=0 // pred_check
    _
  $region71: #{usad_forward.1} parent=0 // pred_check_branch
    %59 = sbr.rel (0) target = $region73
  $region72: #{usad_forward.1} parent=0 // pred_region
    _
  $region73: #{usad_forward.1} parent=0 // pred_fallthru
    _
  // Predicated region
  $region74: #{usad_forward.1} parent=0 // pred_check
    _
  $region75: #{usad_forward.1} parent=0 // pred_check_branch
    %61 = sbr.rel (0) target = $region77
  $region76: #{usad_forward.1} parent=0 // pred_region
    _
  $region77: #{usad_forward.1} parent=0 // pred_fallthru
    _
  %v63 = vld [vmem:[%s0] sm:$0xff]
  %v64 = vld [vmem:[%s0 + $0x8] sm:$0xff]
  %v65 = vld [vmem:[%s0 + $0x10] sm:$0xf]
  %v66 = vld [vmem:[%s1] sm:$0xff]
  %v67 = vld [vmem:[%s1 + $0x8] sm:$0xff]
  %v68 = vld [vmem:[%s2] sm:$0xff]
  %v69 = vld [vmem:[%s2 + $0x8] sm:$0xff]
  %71 = vset.pattern.permute.xlu0 0
  %72 = vperm.xlu0 %71, %v68
  %v73 = vpop.permute.xlu0 %72
  %76 = vset.pattern.permute.xlu0 0
  %77 = vperm.xlu0 %76, %v69
  %v78 = vpop.permute.xlu0 %77
  %vm80 = vcmask 162816
  %v82 = vsel %vm80, %v66, 0
  %v85 = vsel %vm80, %v67, 0
  %vm87 = vcmask 1043456
  %v89 = vsel %vm87, %v65, 0
  %91 = vmatprep.subr.mxu0 0.0
  %92 = vmatpush1.msra.mxu0 %v63
  %93 = vmatprep.subr.mxu0 0.0
  %94 = vmatpush1.msra.mxu0 %v64
  %95 = vmatprep.subr.mxu0 0.0
  %96 = vmatpush1.msra.mxu0 %v89
  %97 = vmatprep.subr.mxu0 0.0
  %98 = vmatpush1.msra.mxu0 0.0
  %99 = vmatprep.subr.mxu0 0.0
  %100 = vmatpush1.msra.mxu0 0.0
  %101 = vmatprep.subr.mxu0 0.0
  %102 = vmatpush1.msra.mxu0 0.0
  %103 = vmatprep.subr.mxu0 0.0
  %104 = vmatpush1.msra.mxu0 0.0
  %105 = vmatprep.subr.mxu0 0.0
  %106 = vmatpush1.msra.mxu0 0.0
  %107 = vmatprep.subr.mxu0 0.0
  %108 = vmatpush1.msra.mxu0 0.0
  %109 = vmatprep.subr.mxu0 0.0
  %110 = vmatpush1.msra.mxu0 0.0
  %111 = vmatprep.subr.mxu0 0.0
  %112 = vmatpush1.msra.mxu0 0.0
  %113 = vmatprep.subr.mxu0 0.0
  %114 = vmatpush1.msra.mxu0 0.0
  %115 = vmatprep.subr.mxu0 0.0
  %116 = vmatpush1.msra.mxu0 0.0
  %117 = vmatprep.subr.mxu0 0.0
  %118 = vmatpush1.msra.mxu0 0.0
  %119 = vmatprep.subr.mxu0 0.0
  %120 = vmatpush1.msra.mxu0 0.0
  %121 = vmatprep.subr.mxu0 0.0
  %122 = vmatpush1.msra.mxu0 0.0
  %123 = vmatprep.subr.mxu0 0.0
  %124 = vmatpush1.msra.mxu0 0.0
  %125 = vmatprep.subr.mxu0 0.0
  %126 = vmatpush1.msra.mxu0 0.0
  %127 = vmatprep.subr.mxu0 0.0
  %128 = vmatpush1.msra.mxu0 0.0
  %129 = vmatprep.subr.mxu0 0.0
  %130 = vmatpush1.msra.mxu0 0.0
  %131 = vmatprep.subr.mxu0 0.0
  %132 = vmatpush1.msra.mxu0 0.0
  %133 = vmatprep.subr.mxu0 0.0
  %134 = vmatpush1.msra.mxu0 0.0
  %135 = vmatprep.subr.mxu0 0.0
  %136 = vmatpush1.msra.mxu0 0.0
  %137 = vmatprep.subr.mxu0 0.0
  %138 = vmatpush1.msra.mxu0 0.0
  %139 = vmatprep.subr.mxu0 0.0
  %140 = vmatpush1.msra.mxu0 0.0
  %141 = vmatprep.subr.mxu0 0.0
  %142 = vmatpush1.msra.mxu0 0.0
  %143 = vmatprep.subr.mxu0 0.0
  %144 = vmatpush1.msra.mxu0 0.0
  %145 = vmatprep.subr.mxu0 0.0
  %146 = vmatpush1.msra.mxu0 0.0
  %147 = vmatprep.subr.mxu0 0.0
  %148 = vmatpush1.msra.mxu0 0.0
  %149 = vmatprep.subr.mxu0 0.0
  %150 = vmatpush1.msra.mxu0 0.0
  %151 = vmatprep.subr.mxu0 0.0
  %152 = vmatpush1.msra.mxu0 0.0
  %153 = vmatprep.subr.mxu0 0.0
  %154 = vmatpush1.msra.mxu0 0.0
  %155 = vmatprep.mubr.f32.mxu0 0.0
  %156 = vmatmul.mubr.f32.gmra.mrb[0].mxu0 %v82
  %v157 = vpop.f32.mrb[0].mxu0
  %v158 = vadd.f32 %v73, %v157
  %v159 = vpop.f32.mrb[0].mxu0
  %160 = vmatprep.mubr.f32.mxu0 0.0
  %161 = vmatmul.mubr.f32.gmra.mrb[0].mxu0 %v85
  %v162 = vpop.f32.mrb[0].mxu0
  %v163 = vadd.f32 %v78, %v162
  %v164 = vpop.f32.mrb[0].mxu0
  %165 = vdwg.mxu0
  %v166 = vmax.f32 %v158, 0.0
  %v167 = vmax.f32 %v163, 0.0
  %v168 = vld [vmem:[%s3] sm:$0xf]
  %v169 = vld [vmem:[%s3 + $0x4] sm:$0xf]
  %v170 = vpack.c.bf16 %v167, %v166
  %v171 = vld [vmem:[%s4] sm:$0xff]
  %v172 = vld [vmem:[%s4 + $0x8] sm:$0xff]
  %174 = vset.pattern.permute.xlu0 0
  %175 = vperm.xlu0 %174, %v171
  %v176 = vpop.permute.xlu0 %175
  %179 = vset.pattern.permute.xlu0 0
  %180 = vperm.xlu0 %179, %v172
  %v181 = vpop.permute.xlu0 %180
  %v185 = vunpack.c.l.b16 %v168
  %v186 = vunpack.c.l.b16 %v169
  %v187 = vpack.c.b16 %v186, %v185
  %vm188 = vcmask 130048
  %v190 = vsel %vm188, %v187, 0
  %192 = vmatprep.subr.bf16.mxu0 0
  %193 = vmatpush1.bf16.msra.mxu0 %v170
  %194 = vmatprep.subr.bf16.mxu0 0
  %195 = vmatpush1.bf16.msra.mxu0 0
  %196 = vmatprep.subr.bf16.mxu0 0
  %197 = vmatpush1.bf16.msra.mxu0 0
  %198 = vmatprep.subr.bf16.mxu0 0
  %199 = vmatpush1.bf16.msra.mxu0 0
  %200 = vmatprep.subr.bf16.mxu0 0
  %201 = vmatpush1.bf16.msra.mxu0 0
  %202 = vmatprep.subr.bf16.mxu0 0
  %203 = vmatpush1.bf16.msra.mxu0 0
  %204 = vmatprep.subr.bf16.mxu0 0
  %205 = vmatpush1.bf16.msra.mxu0 0
  %206 = vmatprep.subr.bf16.mxu0 0
  %207 = vmatpush1.bf16.msra.mxu0 0
  %208 = vmatprep.subr.bf16.mxu0 0
  %209 = vmatpush1.bf16.msra.mxu0 0
  %210 = vmatprep.subr.bf16.mxu0 0
  %211 = vmatpush1.bf16.msra.mxu0 0
  %212 = vmatprep.subr.bf16.mxu0 0
  %213 = vmatpush1.bf16.msra.mxu0 0
  %214 = vmatprep.subr.bf16.mxu0 0
  %215 = vmatpush1.bf16.msra.mxu0 0
  %216 = vmatprep.subr.bf16.mxu0 0
  %217 = vmatpush1.bf16.msra.mxu0 0
  %218 = vmatprep.subr.bf16.mxu0 0
  %219 = vmatpush1.bf16.msra.mxu0 0
  %220 = vmatprep.subr.bf16.mxu0 0
  %221 = vmatpush1.bf16.msra.mxu0 0
  %222 = vmatprep.subr.bf16.mxu0 0
  %223 = vmatpush1.bf16.msra.mxu0 0
  %224 = vmatprep.mubr.bf16.mxu0 0
  %225 = vmatmul.mubr.bf16.gmra.mrb[0].mxu0 %v190
  %v226 = vpop.f32.mrb[0].mxu0
  %v227 = vadd.f32 %v176, %v226
  %v228 = vpop.f32.mrb[0].mxu0
  %v229 = vpop.f32.mrb[0].mxu0
  %v230 = vadd.f32 %v181, %v229
  %v231 = vpop.f32.mrb[0].mxu0
  %232 = vdwg.mxu0
  %v233 = vmax.f32 %v227, 0.0
  %v234 = vmax.f32 %v230, 0.0
  %v235 = vld [vmem:[%s5] sm:$0x7]
  %v236 = vpack.c.bf16 %v234, %v233
  %v237 = vld [vmem:[%s6] sm:$0x1f]
  %239 = vset.pattern.permute.xlu0 0
  %240 = vperm.xlu0 %239, %v237
  %v241 = vpop.permute.xlu0 %240
  %v244 = vsel %vm188, %v235, 0
  %246 = vmatprep.subr.bf16.mxu0 0
  %247 = vmatpush1.bf16.msra.mxu0 %v236
  %248 = vmatprep.subr.bf16.mxu0 0
  %249 = vmatpush1.bf16.msra.mxu0 0
  %250 = vmatprep.subr.bf16.mxu0 0
  %251 = vmatpush1.bf16.msra.mxu0 0
  %252 = vmatprep.subr.bf16.mxu0 0
  %253 = vmatpush1.bf16.msra.mxu0 0
  %254 = vmatprep.subr.bf16.mxu0 0
  %255 = vmatpush1.bf16.msra.mxu0 0
  %256 = vmatprep.subr.bf16.mxu0 0
  %257 = vmatpush1.bf16.msra.mxu0 0
  %258 = vmatprep.subr.bf16.mxu0 0
  %259 = vmatpush1.bf16.msra.mxu0 0
  %260 = vmatprep.subr.bf16.mxu0 0
  %261 = vmatpush1.bf16.msra.mxu0 0
  %262 = vmatprep.subr.bf16.mxu0 0
  %263 = vmatpush1.bf16.msra.mxu0 0
  %264 = vmatprep.subr.bf16.mxu0 0
  %265 = vmatpush1.bf16.msra.mxu0 0
  %266 = vmatprep.subr.bf16.mxu0 0
  %267 = vmatpush1.bf16.msra.mxu0 0
  %268 = vmatprep.subr.bf16.mxu0 0
  %269 = vmatpush1.bf16.msra.mxu0 0
  %270 = vmatprep.subr.bf16.mxu0 0
  %271 = vmatpush1.bf16.msra.mxu0 0
  %272 = vmatprep.subr.bf16.mxu0 0
  %273 = vmatpush1.bf16.msra.mxu0 0
  %274 = vmatprep.subr.bf16.mxu0 0
  %275 = vmatpush1.bf16.msra.mxu0 0
  %276 = vmatprep.subr.bf16.mxu0 0
  %277 = vmatpush1.bf16.msra.mxu0 0
  %278 = vmatprep.mubr.bf16.mxu0 0
  %279 = vmatmul.mubr.bf16.gmra.mrb[0].mxu0 %v244
  %v280 = vpop.f32.mrb[0].mxu0
  %v281 = vadd.f32 %v241, %v280
  %v282 = vpop.f32.mrb[0].mxu0
  %v283 = vpop.f32.mrb[0].mxu0
  %v284 = vpop.f32.mrb[0].mxu0
  %285 = vdwg.mxu0
  %v286 = vmax.f32 %v281, 0.0
  %v287 = vld [vmem:[%s7] sm:$0xf]
  %v288 = vld [vmem:[%s7 + $0x4] sm:$0xf]
  %v289 = vld [vmem:[%s7 + $0x8] sm:$0xf]
  %v290 = vld [vmem:[%s7 + $0xc] sm:$0xf]
  %v291 = vpack.c.bf16 %v286, %v286
  %v292 = vld [vmem:[%s8] sm:$0xff]
  %v293 = vld [vmem:[%s8 + $0x8] sm:$0xff]
  %v294 = vld [vmem:[%s8 + $0x10] sm:$0xff]
  %v295 = vld [vmem:[%s8 + $0x18] sm:$0xff]
  %297 = vset.pattern.permute.xlu0 0
  %298 = vperm.xlu0 %297, %v292
  %v299 = vpop.permute.xlu0 %298
  %302 = vset.pattern.permute.xlu0 0
  %303 = vperm.xlu0 %302, %v293
  %v304 = vpop.permute.xlu0 %303
  %307 = vset.pattern.permute.xlu0 0
  %308 = vperm.xlu0 %307, %v294
  %v309 = vpop.permute.xlu0 %308
  %312 = vset.pattern.permute.xlu0 0
  %313 = vperm.xlu0 %312, %v295
  %v314 = vpop.permute.xlu0 %313
  %v320 = vunpack.c.l.b16 %v287
  %v321 = vunpack.c.l.b16 %v288
  %v322 = vunpack.c.l.b16 %v289
  %v323 = vunpack.c.l.b16 %v290
  %v324 = vpack.c.b16 %v321, %v320
  %v325 = vpack.c.b16 %v323, %v322
  %vm326 = vcmask 39936
  %v328 = vsel %vm326, %v324, 0
  %v331 = vsel %vm326, %v325, 0
  %vm333 = vcmask 1041408
  %vm334 = vcmask 1042432
  %v335 = vsel %vm333, 4294967295, 65535
  %v336 = vsel %vm334, %v335, 0
  %v338 = vand.u32 %v291, %v336
  %340 = vmatprep.subr.bf16.mxu0 0
  %341 = vmatpush1.bf16.msra.mxu0 %v338
  %342 = vmatprep.subr.bf16.mxu0 0
  %343 = vmatpush1.bf16.msra.mxu0 0
  %344 = vmatprep.subr.bf16.mxu0 0
  %345 = vmatpush1.bf16.msra.mxu0 0
  %346 = vmatprep.subr.bf16.mxu0 0
  %347 = vmatpush1.bf16.msra.mxu0 0
  %348 = vmatprep.subr.bf16.mxu0 0
  %349 = vmatpush1.bf16.msra.mxu0 0
  %350 = vmatprep.subr.bf16.mxu0 0
  %351 = vmatpush1.bf16.msra.mxu0 0
  %352 = vmatprep.subr.bf16.mxu0 0
  %353 = vmatpush1.bf16.msra.mxu0 0
  %354 = vmatprep.subr.bf16.mxu0 0
  %355 = vmatpush1.bf16.msra.mxu0 0
  %356 = vmatprep.subr.bf16.mxu0 0
  %357 = vmatpush1.bf16.msra.mxu0 0
  %358 = vmatprep.subr.bf16.mxu0 0
  %359 = vmatpush1.bf16.msra.mxu0 0
  %360 = vmatprep.subr.bf16.mxu0 0
  %361 = vmatpush1.bf16.msra.mxu0 0
  %362 = vmatprep.subr.bf16.mxu0 0
  %363 = vmatpush1.bf16.msra.mxu0 0
  %364 = vmatprep.subr.bf16.mxu0 0
  %365 = vmatpush1.bf16.msra.mxu0 0
  %366 = vmatprep.subr.bf16.mxu0 0
  %367 = vmatpush1.bf16.msra.mxu0 0
  %368 = vmatprep.subr.bf16.mxu0 0
  %369 = vmatpush1.bf16.msra.mxu0 0
  %370 = vmatprep.subr.bf16.mxu0 0
  %371 = vmatpush1.bf16.msra.mxu0 0
  %372 = vmatprep.mubr.bf16.mxu0 0
  %373 = vmatmul.mubr.bf16.gmra.mrb[0].mxu0 %v328
  %v374 = vpop.f32.mrb[0].mxu0
  %v375 = vadd.f32 %v299, %v374
  %v376 = vpop.f32.mrb[0].mxu0
  %v377 = vpop.f32.mrb[0].mxu0
  %v378 = vadd.f32 %v304, %v377
  %v379 = vpop.f32.mrb[0].mxu0
  %380 = vmatprep.mubr.bf16.mxu0 0
  %381 = vmatmul.mubr.bf16.gmra.mrb[0].mxu0 %v331
  %v382 = vpop.f32.mrb[0].mxu0
  %v383 = vadd.f32 %v309, %v382
  %v384 = vpop.f32.mrb[0].mxu0
  %v385 = vpop.f32.mrb[0].mxu0
  %v386 = vadd.f32 %v314, %v385
  %v387 = vpop.f32.mrb[0].mxu0
  %388 = vdwg.mxu0
  %v389 = vmax.f32 %v375, 0.0
  %v390 = vmax.f32 %v378, 0.0
  %v391 = vmax.f32 %v383, 0.0
  %v392 = vmax.f32 %v386, 0.0
  %v393 = vld [vmem:[%s9] sm:$0xf]
  %v394 = vld [vmem:[%s9 + $0x4] sm:$0xf]
  %v395 = vld [vmem:[%s9 + $0x8] sm:$0xf]
  %v396 = vld [vmem:[%s9 + $0xc] sm:$0xf]
  %v397 = vpack.c.bf16 %v390, %v389
  %v398 = vpack.c.bf16 %v392, %v391
  %v399 = vld [vmem:[%s10] sm:$0xff]
  %v400 = vld [vmem:[%s10 + $0x8] sm:$0xff]
  %v401 = vld [vmem:[%s10 + $0x10] sm:$0xff]
  %v402 = vld [vmem:[%s10 + $0x18] sm:$0xff]
  %404 = vset.pattern.permute.xlu0 0
  %405 = vperm.xlu0 %404, %v399
  %v406 = vpop.permute.xlu0 %405
  %409 = vset.pattern.permute.xlu0 0
  %410 = vperm.xlu0 %409, %v400
  %v411 = vpop.permute.xlu0 %410
  %414 = vset.pattern.permute.xlu0 0
  %415 = vperm.xlu0 %414, %v401
  %v416 = vpop.permute.xlu0 %415
  %419 = vset.pattern.permute.xlu0 0
  %420 = vperm.xlu0 %419, %v402
  %v421 = vpop.permute.xlu0 %420
  %v427 = vunpack.c.l.b16 %v393
  %v428 = vunpack.c.l.b16 %v394
  %v429 = vunpack.c.l.b16 %v395
  %v430 = vunpack.c.l.b16 %v396
  %v431 = vpack.c.b16 %v428, %v427
  %v432 = vpack.c.b16 %v430, %v429
  %vm433 = vcmask 261120
  %v435 = vsel %vm433, %v431, 0
  %v438 = vsel %vm433, %v432, 0
  %440 = vmatprep.subr.bf16.mxu0 0
  %441 = vmatpush1.bf16.msra.mxu0 %v397
  %442 = vmatprep.subr.bf16.mxu0 0
  %443 = vmatpush1.bf16.msra.mxu0 %v398
  %444 = vmatprep.subr.bf16.mxu0 0
  %445 = vmatpush1.bf16.msra.mxu0 0
  %446 = vmatprep.subr.bf16.mxu0 0
  %447 = vmatpush1.bf16.msra.mxu0 0
  %448 = vmatprep.subr.bf16.mxu0 0
  %449 = vmatpush1.bf16.msra.mxu0 0
  %450 = vmatprep.subr.bf16.mxu0 0
  %451 = vmatpush1.bf16.msra.mxu0 0
  %452 = vmatprep.subr.bf16.mxu0 0
  %453 = vmatpush1.bf16.msra.mxu0 0
  %454 = vmatprep.subr.bf16.mxu0 0
  %455 = vmatpush1.bf16.msra.mxu0 0
  %456 = vmatprep.subr.bf16.mxu0 0
  %457 = vmatpush1.bf16.msra.mxu0 0
  %458 = vmatprep.subr.bf16.mxu0 0
  %459 = vmatpush1.bf16.msra.mxu0 0
  %460 = vmatprep.subr.bf16.mxu0 0
  %461 = vmatpush1.bf16.msra.mxu0 0
  %462 = vmatprep.subr.bf16.mxu0 0
  %463 = vmatpush1.bf16.msra.mxu0 0
  %464 = vmatprep.subr.bf16.mxu0 0
  %465 = vmatpush1.bf16.msra.mxu0 0
  %466 = vmatprep.subr.bf16.mxu0 0
  %467 = vmatpush1.bf16.msra.mxu0 0
  %468 = vmatprep.subr.bf16.mxu0 0
  %469 = vmatpush1.bf16.msra.mxu0 0
  %470 = vmatprep.subr.bf16.mxu0 0
  %471 = vmatpush1.bf16.msra.mxu0 0
  %472 = vmatprep.mubr.bf16.mxu0 0
  %473 = vmatmul.mubr.bf16.gmra.mrb[0].mxu0 %v435
  %v474 = vpop.f32.mrb[0].mxu0
  %v475 = vadd.f32 %v406, %v474
  %v476 = vpop.f32.mrb[0].mxu0
  %v477 = vpop.f32.mrb[0].mxu0
  %v478 = vadd.f32 %v411, %v477
  %v479 = vpop.f32.mrb[0].mxu0
  %480 = vmatprep.mubr.bf16.mxu0 0
  %481 = vmatmul.mubr.bf16.gmra.mrb[0].mxu0 %v438
  %v482 = vpop.f32.mrb[0].mxu0
  %v483 = vadd.f32 %v416, %v482
  %v484 = vpop.f32.mrb[0].mxu0
  %v485 = vpop.f32.mrb[0].mxu0
  %v486 = vadd.f32 %v421, %v485
  %v487 = vpop.f32.mrb[0].mxu0
  %488 = vdwg.mxu0
  %v489 = vmax.f32 %v475, 0.0
  %v490 = vmax.f32 %v478, 0.0
  %v491 = vmax.f32 %v483, 0.0
  %v492 = vmax.f32 %v486, 0.0
  %v493 = vld [vmem:[%s11] sm:$0xf]
  %v494 = vld [vmem:[%s11 + $0x4] sm:$0xf]
  %v495 = vld [vmem:[%s11 + $0x8] sm:$0xf]
  %v496 = vld [vmem:[%s11 + $0xc] sm:$0xf]
  %v497 = vld [vmem:[%s11 + $0x10] sm:$0xf]
  %v498 = vpack.c.bf16 %v490, %v489
  %v499 = vpack.c.bf16 %v492, %v491
  %v500 = vld [vmem:[%s12] sm:$0xff]
  %v501 = vld [vmem:[%s12 + $0x8] sm:$0xff]
  %v502 = vld [vmem:[%s12 + $0x10] sm:$0xff]
  %v503 = vld [vmem:[%s12 + $0x18] sm:$0xff]
  %v504 = vld [vmem:[%s12 + $0x20] sm:$0xff]
  %506 = vset.pattern.permute.xlu0 0
  %507 = vperm.xlu0 %506, %v500
  %v508 = vpop.permute.xlu0 %507
  %511 = vset.pattern.permute.xlu0 0
  %512 = vperm.xlu0 %511, %v501
  %v513 = vpop.permute.xlu0 %512
  %516 = vset.pattern.permute.xlu0 0
  %517 = vperm.xlu0 %516, %v502
  %v518 = vpop.permute.xlu0 %517
  %521 = vset.pattern.permute.xlu0 0
  %522 = vperm.xlu0 %521, %v503
  %v523 = vpop.permute.xlu0 %522
  %526 = vset.pattern.permute.xlu0 0
  %527 = vperm.xlu0 %526, %v504
  %v528 = vpop.permute.xlu0 %527
  %v535 = vunpack.c.l.b16 %v493
  %v536 = vunpack.c.l.b16 %v494
  %v537 = vunpack.c.l.b16 %v495
  %v538 = vunpack.c.l.b16 %v496
  %v539 = vunpack.c.l.b16 %v497
  %v540 = vpack.c.b16 %v536, %v535
  %v541 = vpack.c.b16 %v538, %v537
  %v542 = vpack.c.b16 %v539, %v539
  %v544 = vsel %vm433, %v540, 0
  %v547 = vsel %vm433, %v541, 0
  %v550 = vsel %vm433, %v542, 0
  %552 = vmatprep.subr.bf16.mxu0 0
  %553 = vmatpush1.bf16.msra.mxu0 %v498
  %554 = vmatprep.subr.bf16.mxu0 0
  %555 = vmatpush1.bf16.msra.mxu0 %v499
  %556 = vmatprep.subr.bf16.mxu0 0
  %557 = vmatpush1.bf16.msra.mxu0 0
  %558 = vmatprep.subr.bf16.mxu0 0
  %559 = vmatpush1.bf16.msra.mxu0 0
  %560 = vmatprep.subr.bf16.mxu0 0
  %561 = vmatpush1.bf16.msra.mxu0 0
  %562 = vmatprep.subr.bf16.mxu0 0
  %563 = vmatpush1.bf16.msra.mxu0 0
  %564 = vmatprep.subr.bf16.mxu0 0
  %565 = vmatpush1.bf16.msra.mxu0 0
  %566 = vmatprep.subr.bf16.mxu0 0
  %567 = vmatpush1.bf16.msra.mxu0 0
  %568 = vmatprep.subr.bf16.mxu0 0
  %569 = vmatpush1.bf16.msra.mxu0 0
  %570 = vmatprep.subr.bf16.mxu0 0
  %571 = vmatpush1.bf16.msra.mxu0 0
  %572 = vmatprep.subr.bf16.mxu0 0
  %573 = vmatpush1.bf16.msra.mxu0 0
  %574 = vmatprep.subr.bf16.mxu0 0
  %575 = vmatpush1.bf16.msra.mxu0 0
  %576 = vmatprep.subr.bf16.mxu0 0
  %577 = vmatpush1.bf16.msra.mxu0 0
  %578 = vmatprep.subr.bf16.mxu0 0
  %579 = vmatpush1.bf16.msra.mxu0 0
  %580 = vmatprep.subr.bf16.mxu0 0
  %581 = vmatpush1.bf16.msra.mxu0 0
  %582 = vmatprep.subr.bf16.mxu0 0
  %583 = vmatpush1.bf16.msra.mxu0 0
  %584 = vmatprep.mubr.bf16.mxu0 0
  %585 = vmatmul.mubr.bf16.gmra.mrb[0].mxu0 %v544
  %v586 = vpop.f32.mrb[0].mxu0
  %v587 = vadd.f32 %v508, %v586
  %v588 = vpop.f32.mrb[0].mxu0
  %v589 = vpop.f32.mrb[0].mxu0
  %v590 = vadd.f32 %v513, %v589
  %v591 = vpop.f32.mrb[0].mxu0
  %592 = vmatprep.mubr.bf16.mxu0 0
  %593 = vmatmul.mubr.bf16.gmra.mrb[0].mxu0 %v547
  %v594 = vpop.f32.mrb[0].mxu0
  %v595 = vadd.f32 %v518, %v594
  %v596 = vpop.f32.mrb[0].mxu0
  %v597 = vpop.f32.mrb[0].mxu0
  %v598 = vadd.f32 %v523, %v597
  %v599 = vpop.f32.mrb[0].mxu0
  %600 = vmatprep.mubr.bf16.mxu0 0
  %601 = vmatmul.mubr.bf16.gmra.mrb[0].mxu0 %v550
  %v602 = vpop.f32.mrb[0].mxu0
  %v603 = vadd.f32 %v528, %v602
  %v604 = vpop.f32.mrb[0].mxu0
  %v605 = vpop.f32.mrb[0].mxu0
  %v606 = vpop.f32.mrb[0].mxu0
  %607 = vdwg.mxu0
  %v608 = vmul.f32 %v587, 0.5
  %v609 = vmul.f32 %v590, 0.5
  %v610 = vmul.f32 %v595, 0.5
  %v611 = vmul.f32 %v598, 0.5
  %v612 = vmul.f32 %v603, 0.5
  %v613 = vtanh.pop %v608
  %v614 = vtanh.pop %v609
  %v615 = vtanh.pop %v610
  %v616 = vtanh.pop %v611
  %v617 = vtanh.pop %v612
  %v618 = vmul.f32 %v613, 0.5
  %v619 = vmul.f32 %v614, 0.5
  %v620 = vmul.f32 %v615, 0.5
  %v621 = vmul.f32 %v616, 0.5
  %v622 = vmul.f32 %v617, 0.5
  %v623 = vadd.f32 %v618, 0.5
  %v624 = vadd.f32 %v619, 0.5
  %v625 = vadd.f32 %v620, 0.5
  %v626 = vadd.f32 %v621, 0.5
  %v627 = vadd.f32 %v622, 0.5
  %v629 = vsel %vm87, %v625, 0
  %631 = vmatprep.subr.mxu0 0.0
  %632 = vmatpush1.msra.mxu0 %v623
  %633 = vmatprep.subr.mxu0 0.0
  %634 = vmatpush1.msra.mxu0 %v624
  %635 = vmatprep.subr.mxu0 0.0
  %636 = vmatpush1.msra.mxu0 %v629
  %637 = vmatprep.subr.mxu0 0.0
  %638 = vmatpush1.msra.mxu0 0.0
  %639 = vmatprep.subr.mxu0 0.0
  %640 = vmatpush1.msra.mxu0 0.0
  %641 = vmatprep.subr.mxu0 0.0
  %642 = vmatpush1.msra.mxu0 0.0
  %643 = vmatprep.subr.mxu0 0.0
  %644 = vmatpush1.msra.mxu0 0.0
  %645 = vmatprep.subr.mxu0 0.0
  %646 = vmatpush1.msra.mxu0 0.0
  %647 = vmatprep.subr.mxu0 0.0
  %648 = vmatpush1.msra.mxu0 0.0
  %649 = vmatprep.subr.mxu0 0.0
  %650 = vmatpush1.msra.mxu0 0.0
  %651 = vmatprep.subr.mxu0 0.0
  %652 = vmatpush1.msra.mxu0 0.0
  %653 = vmatprep.subr.mxu0 0.0
  %654 = vmatpush1.msra.mxu0 0.0
  %655 = vmatprep.subr.mxu0 0.0
  %656 = vmatpush1.msra.mxu0 0.0
  %657 = vmatprep.subr.mxu0 0.0
  %658 = vmatpush1.msra.mxu0 0.0
  %659 = vmatprep.subr.mxu0 0.0
  %660 = vmatpush1.msra.mxu0 0.0
  %661 = vmatprep.subr.mxu0 0.0
  %662 = vmatpush1.msra.mxu0 0.0
  %663 = vmatprep.subr.mxu0 0.0
  %664 = vmatpush1.msra.mxu0 0.0
  %665 = vmatprep.subr.mxu0 0.0
  %666 = vmatpush1.msra.mxu0 0.0
  %667 = vmatprep.subr.mxu0 0.0
  %668 = vmatpush1.msra.mxu0 0.0
  %669 = vmatprep.subr.mxu0 0.0
  %670 = vmatpush1.msra.mxu0 0.0
  %671 = vmatprep.subr.mxu0 0.0
  %672 = vmatpush1.msra.mxu0 0.0
  %673 = vmatprep.subr.mxu0 0.0
  %674 = vmatpush1.msra.mxu0 0.0
  %675 = vmatprep.subr.mxu0 0.0
  %676 = vmatpush1.msra.mxu0 0.0
  %677 = vmatprep.subr.mxu0 0.0
  %678 = vmatpush1.msra.mxu0 0.0
  %679 = vmatprep.subr.mxu0 0.0
  %680 = vmatpush1.msra.mxu0 0.0
  %681 = vmatprep.subr.mxu0 0.0
  %682 = vmatpush1.msra.mxu0 0.0
  %683 = vmatprep.subr.mxu0 0.0
  %684 = vmatpush1.msra.mxu0 0.0
  %685 = vmatprep.subr.mxu0 0.0
  %686 = vmatpush1.msra.mxu0 0.0
  %687 = vmatprep.subr.mxu0 0.0
  %688 = vmatpush1.msra.mxu0 0.0
  %689 = vmatprep.subr.mxu0 0.0
  %690 = vmatpush1.msra.mxu0 0.0
  %691 = vmatprep.subr.mxu0 0.0
  %692 = vmatpush1.msra.mxu0 0.0
  %693 = vmatprep.subr.mxu0 0.0
  %694 = vmatpush1.msra.mxu0 0.0
  %695 = vmatprep.mubr.f32.mxu0 0.0
  %696 = vmatmul.mubr.f32.gmra.mrb[0].mxu0 %v82
  %v697 = vpop.f32.mrb[0].mxu0
  %v698 = vadd.f32 %v73, %v697
  %v699 = vpop.f32.mrb[0].mxu0
  %700 = vmatprep.mubr.f32.mxu0 0.0
  %701 = vmatmul.mubr.f32.gmra.mrb[0].mxu0 %v85
  %v702 = vpop.f32.mrb[0].mxu0
  %v703 = vadd.f32 %v78, %v702
  %v704 = vpop.f32.mrb[0].mxu0
  %705 = vdwg.mxu0
  %v706 = vmax.f32 %v698, 0.0
  %v707 = vmax.f32 %v703, 0.0
  %v708 = vpack.c.bf16 %v707, %v706
  %709 = vmatprep.subr.bf16.mxu0 0
  %710 = vmatpush1.bf16.msra.mxu0 %v708
  %711 = vmatprep.subr.bf16.mxu0 0
  %712 = vmatpush1.bf16.msra.mxu0 0
  %713 = vmatprep.subr.bf16.mxu0 0
  %714 = vmatpush1.bf16.msra.mxu0 0
  %715 = vmatprep.subr.bf16.mxu0 0
  %716 = vmatpush1.bf16.msra.mxu0 0
  %717 = vmatprep.subr.bf16.mxu0 0
  %718 = vmatpush1.bf16.msra.mxu0 0
  %719 = vmatprep.subr.bf16.mxu0 0
  %720 = vmatpush1.bf16.msra.mxu0 0
  %721 = vmatprep.subr.bf16.mxu0 0
  %722 = vmatpush1.bf16.msra.mxu0 0
  %723 = vmatprep.subr.bf16.mxu0 0
  %724 = vmatpush1.bf16.msra.mxu0 0
  %725 = vmatprep.subr.bf16.mxu0 0
  %726 = vmatpush1.bf16.msra.mxu0 0
  %727 = vmatprep.subr.bf16.mxu0 0
  %728 = vmatpush1.bf16.msra.mxu0 0
  %729 = vmatprep.subr.bf16.mxu0 0
  %730 = vmatpush1.bf16.msra.mxu0 0
  %731 = vmatprep.subr.bf16.mxu0 0
  %732 = vmatpush1.bf16.msra.mxu0 0
  %733 = vmatprep.subr.bf16.mxu0 0
  %734 = vmatpush1.bf16.msra.mxu0 0
  %735 = vmatprep.subr.bf16.mxu0 0
  %736 = vmatpush1.bf16.msra.mxu0 0
  %737 = vmatprep.subr.bf16.mxu0 0
  %738 = vmatpush1.bf16.msra.mxu0 0
  %739 = vmatprep.subr.bf16.mxu0 0
  %740 = vmatpush1.bf16.msra.mxu0 0
  %741 = vmatprep.mubr.bf16.mxu0 0
  %742 = vmatmul.mubr.bf16.gmra.mrb[0].mxu0 %v190
  %v743 = vpop.f32.mrb[0].mxu0
  %v744 = vadd.f32 %v176, %v743
  %v745 = vpop.f32.mrb[0].mxu0
  %v746 = vpop.f32.mrb[0].mxu0
  %v747 = vadd.f32 %v181, %v746
  %v748 = vpop.f32.mrb[0].mxu0
  %749 = vdwg.mxu0
  %v750 = vmax.f32 %v744, 0.0
  %v751 = vmax.f32 %v747, 0.0
  %v752 = vpack.c.bf16 %v751, %v750
  %753 = vmatprep.subr.bf16.mxu0 0
  %754 = vmatpush1.bf16.msra.mxu0 %v752
  %755 = vmatprep.subr.bf16.mxu0 0
  %756 = vmatpush1.bf16.msra.mxu0 0
  %757 = vmatprep.subr.bf16.mxu0 0
  %758 = vmatpush1.bf16.msra.mxu0 0
  %759 = vmatprep.subr.bf16.mxu0 0
  %760 = vmatpush1.bf16.msra.mxu0 0
  %761 = vmatprep.subr.bf16.mxu0 0
  %762 = vmatpush1.bf16.msra.mxu0 0
  %763 = vmatprep.subr.bf16.mxu0 0
  %764 = vmatpush1.bf16.msra.mxu0 0
  %765 = vmatprep.subr.bf16.mxu0 0
  %766 = vmatpush1.bf16.msra.mxu0 0
  %767 = vmatprep.subr.bf16.mxu0 0
  %768 = vmatpush1.bf16.msra.mxu0 0
  %769 = vmatprep.subr.bf16.mxu0 0
  %770 = vmatpush1.bf16.msra.mxu0 0
  %771 = vmatprep.subr.bf16.mxu0 0
  %772 = vmatpush1.bf16.msra.mxu0 0
  %773 = vmatprep.subr.bf16.mxu0 0
  %774 = vmatpush1.bf16.msra.mxu0 0
  %775 = vmatprep.subr.bf16.mxu0 0
  %776 = vmatpush1.bf16.msra.mxu0 0
  %777 = vmatprep.subr.bf16.mxu0 0
  %778 = vmatpush1.bf16.msra.mxu0 0
  %779 = vmatprep.subr.bf16.mxu0 0
  %780 = vmatpush1.bf16.msra.mxu0 0
  %781 = vmatprep.subr.bf16.mxu0 0
  %782 = vmatpush1.bf16.msra.mxu0 0
  %783 = vmatprep.subr.bf16.mxu0 0
  %784 = vmatpush1.bf16.msra.mxu0 0
  %785 = vmatprep.mubr.bf16.mxu0 0
  %786 = vmatmul.mubr.bf16.gmra.mrb[0].mxu0 %v244
  %v787 = vpop.f32.mrb[0].mxu0
  %v788 = vadd.f32 %v241, %v787
  %v789 = vpop.f32.mrb[0].mxu0
  %v790 = vpop.f32.mrb[0].mxu0
  %v791 = vpop.f32.mrb[0].mxu0
  %792 = vdwg.mxu0
  %v793 = vmax.f32 %v788, 0.0
  %v794 = vld [vmem:[%s13] sm:$0xf]
  %v795 = vld [vmem:[%s13 + $0x4] sm:$0xf]
  %v796 = vpack.c.bf16 %v793, %v793
  %v797 = vld [vmem:[%s14] sm:$0xff]
  %v798 = vld [vmem:[%s14 + $0x8] sm:$0xff]
  %800 = vset.pattern.permute.xlu0 0
  %801 = vperm.xlu0 %800, %v797
  %v802 = vpop.permute.xlu0 %801
  %805 = vset.pattern.permute.xlu0 0
  %806 = vperm.xlu0 %805, %v798
  %v807 = vpop.permute.xlu0 %806
  %v811 = vunpack.c.l.b16 %v794
  %v812 = vunpack.c.l.b16 %v795
  %v813 = vpack.c.b16 %v812, %v811
  %v815 = vsel %vm326, %v813, 0
  %v818 = vand.u32 %v796, %v336
  %820 = vmatprep.subr.bf16.mxu0 0
  %821 = vmatpush1.bf16.msra.mxu0 %v818
  %822 = vmatprep.subr.bf16.mxu0 0
  %823 = vmatpush1.bf16.msra.mxu0 0
  %824 = vmatprep.subr.bf16.mxu0 0
  %825 = vmatpush1.bf16.msra.mxu0 0
  %826 = vmatprep.subr.bf16.mxu0 0
  %827 = vmatpush1.bf16.msra.mxu0 0
  %828 = vmatprep.subr.bf16.mxu0 0
  %829 = vmatpush1.bf16.msra.mxu0 0
  %830 = vmatprep.subr.bf16.mxu0 0
  %831 = vmatpush1.bf16.msra.mxu0 0
  %832 = vmatprep.subr.bf16.mxu0 0
  %833 = vmatpush1.bf16.msra.mxu0 0
  %834 = vmatprep.subr.bf16.mxu0 0
  %835 = vmatpush1.bf16.msra.mxu0 0
  %836 = vmatprep.subr.bf16.mxu0 0
  %837 = vmatpush1.bf16.msra.mxu0 0
  %838 = vmatprep.subr.bf16.mxu0 0
  %839 = vmatpush1.bf16.msra.mxu0 0
  %840 = vmatprep.subr.bf16.mxu0 0
  %841 = vmatpush1.bf16.msra.mxu0 0
  %842 = vmatprep.subr.bf16.mxu0 0
  %843 = vmatpush1.bf16.msra.mxu0 0
  %844 = vmatprep.subr.bf16.mxu0 0
  %845 = vmatpush1.bf16.msra.mxu0 0
  %846 = vmatprep.subr.bf16.mxu0 0
  %847 = vmatpush1.bf16.msra.mxu0 0
  %848 = vmatprep.subr.bf16.mxu0 0
  %849 = vmatpush1.bf16.msra.mxu0 0
  %850 = vmatprep.subr.bf16.mxu0 0
  %851 = vmatpush1.bf16.msra.mxu0 0
  %852 = vmatprep.mubr.bf16.mxu0 0
  %853 = vmatmul.mubr.bf16.gmra.mrb[0].mxu0 %v815
  %v854 = vpop.f32.mrb[0].mxu0
  %v855 = vadd.f32 %v802, %v854
  %v856 = vpop.f32.mrb[0].mxu0
  %v857 = vpop.f32.mrb[0].mxu0
  %v858 = vadd.f32 %v807, %v857
  %v859 = vpop.f32.mrb[0].mxu0
  %860 = vdwg.mxu0
  %v861 = vmax.f32 %v855, 0.0
  %v862 = vmax.f32 %v858, 0.0
  %v863 = vld [vmem:[%s15] sm:$0xf]
  %v864 = vld [vmem:[%s15 + $0x4] sm:$0xf]
  %v865 = vpack.c.bf16 %v862, %v861
  %v866 = vld [vmem:[%s16] sm:$0xff]
  %v867 = vld [vmem:[%s16 + $0x8] sm:$0xff]
  %869 = vset.pattern.permute.xlu0 0
  %870 = vperm.xlu0 %869, %v866
  %v871 = vpop.permute.xlu0 %870
  %874 = vset.pattern.permute.xlu0 0
  %875 = vperm.xlu0 %874, %v867
  %v876 = vpop.permute.xlu0 %875
  %v880 = vunpack.c.l.b16 %v863
  %v881 = vunpack.c.l.b16 %v864
  %v882 = vpack.c.b16 %v881, %v880
  %v884 = vsel %vm188, %v882, 0
  %886 = vmatprep.subr.bf16.mxu0 0
  %887 = vmatpush1.bf16.msra.mxu0 %v865
  %888 = vmatprep.subr.bf16.mxu0 0
  %889 = vmatpush1.bf16.msra.mxu0 0
  %890 = vmatprep.subr.bf16.mxu0 0
  %891 = vmatpush1.bf16.msra.mxu0 0
  %892 = vmatprep.subr.bf16.mxu0 0
  %893 = vmatpush1.bf16.msra.mxu0 0
  %894 = vmatprep.subr.bf16.mxu0 0
  %895 = vmatpush1.bf16.msra.mxu0 0
  %896 = vmatprep.subr.bf16.mxu0 0
  %897 = vmatpush1.bf16.msra.mxu0 0
  %898 = vmatprep.subr.bf16.mxu0 0
  %899 = vmatpush1.bf16.msra.mxu0 0
  %900 = vmatprep.subr.bf16.mxu0 0
  %901 = vmatpush1.bf16.msra.mxu0 0
  %902 = vmatprep.subr.bf16.mxu0 0
  %903 = vmatpush1.bf16.msra.mxu0 0
  %904 = vmatprep.subr.bf16.mxu0 0
  %905 = vmatpush1.bf16.msra.mxu0 0
  %906 = vmatprep.subr.bf16.mxu0 0
  %907 = vmatpush1.bf16.msra.mxu0 0
  %908 = vmatprep.subr.bf16.mxu0 0
  %909 = vmatpush1.bf16.msra.mxu0 0
  %910 = vmatprep.subr.bf16.mxu0 0
  %911 = vmatpush1.bf16.msra.mxu0 0
  %912 = vmatprep.subr.bf16.mxu0 0
  %913 = vmatpush1.bf16.msra.mxu0 0
  %914 = vmatprep.subr.bf16.mxu0 0
  %915 = vmatpush1.bf16.msra.mxu0 0
  %916 = vmatprep.subr.bf16.mxu0 0
  %917 = vmatpush1.bf16.msra.mxu0 0
  %918 = vmatprep.mubr.bf16.mxu0 0
  %919 = vmatmul.mubr.bf16.gmra.mrb[0].mxu0 %v884
  %v920 = vpop.f32.mrb[0].mxu0
  %v921 = vadd.f32 %v871, %v920
  %v922 = vpop.f32.mrb[0].mxu0
  %v923 = vpop.f32.mrb[0].mxu0
  %v924 = vadd.f32 %v876, %v923
  %v925 = vpop.f32.mrb[0].mxu0
  %926 = vdwg.mxu0
  %v927 = vmax.f32 %v921, 0.0
  %v928 = vmax.f32 %v924, 0.0
  %v929 = vld [vmem:[%s17] sm:$0xf]
  %v930 = vld [vmem:[%s17 + $0x4] sm:$0xf]
  %v931 = vld [vmem:[%s17 + $0x8] sm:$0x3]
  %v932 = vpack.c.bf16 %v928, %v927
  %v933 = vld [vmem:[%s18] sm:$0xff]
  %v934 = vld [vmem:[%s18 + $0x8] sm:$0xff]
  %v935 = vld [vmem:[%s18 + $0x10] sm:$0xf]
  %937 = vset.pattern.permute.xlu0 0
  %938 = vperm.xlu0 %937, %v933
  %v939 = vpop.permute.xlu0 %938
  %942 = vset.pattern.permute.xlu0 0
  %943 = vperm.xlu0 %942, %v934
  %v944 = vpop.permute.xlu0 %943
  %947 = vset.pattern.permute.xlu0 0
  %948 = vperm.xlu0 %947, %v935
  %v949 = vpop.permute.xlu0 %948
  %v954 = vunpack.c.l.b16 %v929
  %v955 = vunpack.c.l.b16 %v930
  %v956 = vunpack.c.l.b16 %v931
  %v957 = vpack.c.b16 %v955, %v954
  %v958 = vpack.c.b16 %v956, %v956
  %v960 = vsel %vm188, %v957, 0
  %v963 = vsel %vm188, %v958, 0
  %965 = vmatprep.subr.bf16.mxu0 0
  %966 = vmatpush1.bf16.msra.mxu0 %v932
  %967 = vmatprep.subr.bf16.mxu0 0
  %968 = vmatpush1.bf16.msra.mxu0 0
  %969 = vmatprep.subr.bf16.mxu0 0
  %970 = vmatpush1.bf16.msra.mxu0 0
  %971 = vmatprep.subr.bf16.mxu0 0
  %972 = vmatpush1.bf16.msra.mxu0 0
  %973 = vmatprep.subr.bf16.mxu0 0
  %974 = vmatpush1.bf16.msra.mxu0 0
  %975 = vmatprep.subr.bf16.mxu0 0
  %976 = vmatpush1.bf16.msra.mxu0 0
  %977 = vmatprep.subr.bf16.mxu0 0
  %978 = vmatpush1.bf16.msra.mxu0 0
  %979 = vmatprep.subr.bf16.mxu0 0
  %980 = vmatpush1.bf16.msra.mxu0 0
  %981 = vmatprep.subr.bf16.mxu0 0
  %982 = vmatpush1.bf16.msra.mxu0 0
  %983 = vmatprep.subr.bf16.mxu0 0
  %984 = vmatpush1.bf16.msra.mxu0 0
  %985 = vmatprep.subr.bf16.mxu0 0
  %986 = vmatpush1.bf16.msra.mxu0 0
  %987 = vmatprep.subr.bf16.mxu0 0
  %988 = vmatpush1.bf16.msra.mxu0 0
  %989 = vmatprep.subr.bf16.mxu0 0
  %990 = vmatpush1.bf16.msra.mxu0 0
  %991 = vmatprep.subr.bf16.mxu0 0
  %992 = vmatpush1.bf16.msra.mxu0 0
  %993 = vmatprep.subr.bf16.mxu0 0
  %994 = vmatpush1.bf16.msra.mxu0 0
  %995 = vmatprep.subr.bf16.mxu0 0
  %996 = vmatpush1.bf16.msra.mxu0 0
  %997 = vmatprep.mubr.bf16.mxu0 0
  %998 = vmatmul.mubr.bf16.gmra.mrb[0].mxu0 %v960
  %v999 = vpop.f32.mrb[0].mxu0
  %v1000 = vadd.f32 %v939, %v999
  %v1001 = vpop.f32.mrb[0].mxu0
  %v1002 = vpop.f32.mrb[0].mxu0
  %v1003 = vadd.f32 %v944, %v1002
  %v1004 = vpop.f32.mrb[0].mxu0
  %1005 = vmatprep.mubr.bf16.mxu0 0
  %1006 = vmatmul.mubr.bf16.gmra.mrb[0].mxu0 %v963
  %v1007 = vpop.f32.mrb[0].mxu0
  %v1008 = vadd.f32 %v949, %v1007
  %v1009 = vpop.f32.mrb[0].mxu0
  %v1010 = vpop.f32.mrb[0].mxu0
  %v1011 = vpop.f32.mrb[0].mxu0
  %1012 = vdwg.mxu0
  %v1013 = vmul.f32 %v1000, 0.5
  %v1014 = vmul.f32 %v1003, 0.5
  %v1015 = vmul.f32 %v1008, 0.5
  %v1016 = vtanh.pop %v1013
  %v1017 = vtanh.pop %v1014
  %v1018 = vtanh.pop %v1015
  %v1019 = vmul.f32 %v1016, 0.5
  %v1020 = vmul.f32 %v1017, 0.5
  %v1021 = vmul.f32 %v1018, 0.5
  %v1022 = vadd.f32 %v1019, 0.5
  %v1023 = vadd.f32 %v1020, 0.5
  %v1024 = vadd.f32 %v1021, 0.5
  %1025 = vst [vmem:[%s19] sm:$0xff] %v623
  %1026 = vst [vmem:[%s19 + $0x8] sm:$0xff] %v624
  %1027 = vst [vmem:[%s19 + $0x10] sm:$0xff] %v625
  %1028 = vst [vmem:[%s19 + $0x18] sm:$0xff] %v626
  %1029 = vst [vmem:[%s19 + $0x20] sm:$0xff] %v627
  %1030 = vst [vmem:[%s19 + $0x28] sm:$0xff] %v1022
  %1031 = vst [vmem:[%s19 + $0x30] sm:$0xff] %v1023
  %1032 = vst [vmem:[%s19 + $0x38] sm:$0xf] %v1024
  // Predicated region
  $region78: #{usad_forward.1} parent=0 // pred_check
    _
  $region79: #{usad_forward.1} parent=0 // pred_check_branch
    %1034 = sbr.rel (0) target = $region81
  $region80: #{usad_forward.1} parent=0 // pred_region
    _
  $region81: #{usad_forward.1} parent=0 // pred_fallthru
    _
  // Predicated region
  $region82: #{usad_forward.1} parent=0 // pred_check
    _
  $region83: #{usad_forward.1} parent=0 // pred_check_branch
    %1036 = sbr.rel (0) target = $region85
  $region84: #{usad_forward.1} parent=0 // pred_region
    _
  $region85: #{usad_forward.1} parent=0 // pred_fallthru
    _

</llo_original>
